<compile_context>
chip_gen: v6e
topology: v6e:2x2x1
jax: 0.10.0
libtpu: 0.0.40
codegen_flags: <defaults>
</compile_context>

<pallas_src>
import functools

import jax
import jax.numpy as jnp
import numpy as np
from jax.experimental import pallas as pl
from jax.experimental.pallas import tpu as pltpu

EPS = 1e-12           # F.normalize default eps
EPS2 = EPS * EPS      # max(sqrt(s), eps) == sqrt(max(s, eps*eps))
LANE = 128
SUBLANE_F32 = 8
SUBLANE_BF16 = 16


def _round_up(v, m):
    return ((v + m - 1) // m) * m


# --------------------------------------------------------------------------- kernel 1: NetVLAD
def netvlad_kernel(x_ref, wb_ref, bb_ref, wa_ref, ba_ref, cent_ref, out_ref,
                   agg_ref, ssum_ref, *, true_p, tile_p):
    p_idx = pl.program_id(1)
    n_pix = pl.num_programs(1)

    @pl.when(p_idx == 0)
    def _init():
        agg_ref[...] = jnp.zeros_like(agg_ref)
        ssum_ref[...] = jnp.zeros_like(ssum_ref)

    x = x_ref[0]                                                          # (Cinp, TP) bf16

    # base_model: 1x1 conv -> feature tile (Dp, TP), f32 accumulation on the MXU.
    feats = jnp.dot(wb_ref[...], x,
                    preferred_element_type=jnp.float32) + bb_ref[...]

    # per-pixel L2 normalize over the descriptor dim.
    inv_fn = jax.lax.rsqrt(
        jnp.maximum(jnp.sum(feats * feats, axis=0, keepdims=True), EPS2))
    fn16 = (feats * inv_fn).astype(jnp.bfloat16)                          # (Dp, TP)

    # soft assignment: 1x1 conv -> softmax over clusters (exact reciprocal, per review).
    logits = jnp.dot(wa_ref[...], fn16,
                     preferred_element_type=jnp.float32) + ba_ref[...]    # (Kp, TP)
    logits = logits - jnp.max(logits, axis=0, keepdims=True)
    e = jnp.exp(logits)
    sa = e * pl.reciprocal(jnp.sum(e, axis=0, keepdims=True))             # (Kp, TP) f32

    # mask zero-padded pixel columns (bias makes them non-zero, they must not contribute).
    if true_p % tile_p != 0:
        lane = jax.lax.broadcasted_iota(jnp.int32, (1, tile_p), 1)
        valid = (p_idx * tile_p + lane) < true_p
        sa = jnp.where(valid, sa, 0.0)

    # VLAD accumulation across pixel tiles.
    agg_ref[...] += jax.lax.dot_general(
        sa.astype(jnp.bfloat16), fn16, (((1,), (1,)), ((), ())),
        preferred_element_type=jnp.float32)                               # (Kp, Dp)
    ssum_ref[...] += jnp.sum(sa, axis=1, keepdims=True)                   # (Kp, 1)

    @pl.when(p_idx == n_pix - 1)
    def _finalize():
        vlad = agg_ref[...] - cent_ref[...] * ssum_ref[...]               # (Kp, Dp)
        # intra-normalization (per cluster, over the descriptor dim).
        inv_c = jax.lax.rsqrt(
            jnp.maximum(jnp.sum(vlad * vlad, axis=1, keepdims=True), EPS2))
        vlad = vlad * inv_c
        # global L2 norm over the flattened descriptor (pads are exact zeros).
        inv_g = jax.lax.rsqrt(jnp.maximum(jnp.sum(vlad * vlad), EPS2))
        out_ref[0] = vlad * inv_g


# --------------------------------------------------- kernel 2: PCA conv + final L2 normalize
def pca_kernel(v_ref, wq_ref, bp_ref, out_ref, acc_ref):
    k = pl.program_id(0)

    @pl.when(k == 0)
    def _init():
        acc_ref[...] = jnp.zeros_like(acc_ref)

    acc_ref[...] += jnp.dot(v_ref[...], wq_ref[...],
                            preferred_element_type=jnp.float32)           # (N, dimp)

    @pl.when(k == pl.num_programs(0) - 1)
    def _finalize():
        y = acc_ref[...] + bp_ref[...]
        inv_y = jax.lax.rsqrt(
            jnp.maximum(jnp.sum(y * y, axis=1, keepdims=True), EPS2))
        out_ref[...] = y * inv_y


# ----------------------------------------------------------------------------------- wrapper
def embednet_pca_forward(x, Wb, bb, Wa, ba, cent, Wp, bp, *, tile_p=1024):
    N, Cin, H, W = x.shape
    P = H * W
    D = Wb.shape[0]
    K = Wa.shape[0]
    dim = Wp.shape[0]

    # padded sizes (all pads are exact no-ops through the math)
    Dp = _round_up(D, LANE)                 # descriptor dim -> lanes
    Kp = _round_up(K, SUBLANE_F32)          # clusters -> f32 sublanes
    dimp = _round_up(dim, LANE)             # PCA dim -> lanes
    Cinp = _round_up(Cin, SUBLANE_BF16)     # input channels -> bf16 sublanes
    TP = min(_round_up(max(tile_p, LANE), LANE), _round_up(P, LANE))      # pixel tile
    Pp = _round_up(P, TP)

    f32 = jnp.float32
    Wb_p = jnp.zeros((Dp, Cinp), f32).at[:D, :Cin].set(Wb)
    bb_p = jnp.zeros((Dp, 1), f32).at[:D, :].set(bb.reshape(D, 1))
    Wa_p = jnp.zeros((Kp, Dp), f32).at[:K, :D].set(Wa)
    # padded clusters get a hugely negative bias -> exp underflows to exactly 0 in the softmax.
    ba_p = jnp.full((Kp, 1), -1e30, f32).at[:K, :].set(ba.reshape(K, 1))
    cent_p = jnp.zeros((Kp, Dp), f32).at[:K, :D].set(cent)
    # PCA weight reorganized to (Kp*Dp, dimp):  Wq[k*Dp + d, o] = Wp[o, k*D + d]
    Wq = jnp.zeros((Kp, Dp, dimp), f32).at[:K, :D, :dim].set(
        jnp.transpose(Wp.reshape(dim, K, D), (1, 2, 0))).reshape(Kp * Dp, dimp)
    bp_p = jnp.zeros((1, dimp), f32).at[:, :dim].set(bp.reshape(1, dim))

    # bf16 MXU operands (f32 accumulation inside the kernels).
    xf = jnp.zeros((N, Cinp, Pp), jnp.bfloat16).at[:, :Cin, :P].set(
        x.reshape(N, Cin, P).astype(jnp.bfloat16))
    Wb16 = Wb_p.astype(jnp.bfloat16)
    Wa16 = Wa_p.astype(jnp.bfloat16)
    Wq16 = Wq.astype(jnp.bfloat16)

    # VMEM budget: x tile (double-buffered) + weights + output block + scratch, with headroom,
    # capped at 48 MiB so it stays inside v7x's 64 MiB physical VMEM (v5e/v6e have 128 MiB).
    resident = (2 * Cinp * TP * 2
                + 2 * (Dp * Cinp * 2 + Dp * 4 + Kp * Dp * 2 + Kp * 4 + Kp * Dp * 4)
                + 2 * Kp * Dp * 4
                + Kp * Dp * 4 + Kp * 4)
    vmem_limit = int(min(max(4 * resident, 32 * 1024 * 1024), 48 * 1024 * 1024))

    flops1 = 2 * N * Pp * Dp * (Cinp + 2 * Kp)
    bytes1 = (N * Cinp * Pp * 2
              + Dp * Cinp * 2 + Dp * 4 + Kp * Dp * 2 + Kp * 4 + Kp * Dp * 4
              + N * Kp * Dp * 4)
    cost1 = pl.CostEstimate(flops=flops1, transcendentals=N * Pp * Kp,
                            bytes_accessed=bytes1)

    kern1 = functools.partial(netvlad_kernel, true_p=P, tile_p=TP)

    def netvlad_call(single_buffer_weights):
        if single_buffer_weights:
            # grid-invariant weights: single-buffer to halve their VMEM residency.
            def const_spec(shape):
                return pl.BlockSpec(shape, lambda n, p: (0, 0),
                                    pipeline_mode=pl.Buffered(1))
        else:
            def const_spec(shape):
                return pl.BlockSpec(shape, lambda n, p: (0, 0))
        return pl.pallas_call(
            kern1,
            out_shape=jax.ShapeDtypeStruct((N, Kp, Dp), jnp.float32),
            grid_spec=pltpu.PrefetchScalarGridSpec(
                num_scalar_prefetch=0,
                grid=(N, Pp // TP),
                in_specs=[
                    pl.BlockSpec((1, Cinp, TP), lambda n, p: (n, 0, p)),  # x pixel tile
                    const_spec((Dp, Cinp)),      # base conv weight
                    const_spec((Dp, 1)),         # base conv bias
                    const_spec((Kp, Dp)),        # vlad assign weight
                    const_spec((Kp, 1)),         # vlad assign bias
                    const_spec((Kp, Dp)),        # centroids
                ],
                out_specs=pl.BlockSpec((1, Kp, Dp), lambda n, p: (n, 0, 0)),
                scratch_shapes=[
                    pltpu.VMEM((Kp, Dp), jnp.float32),   # VLAD aggregate accumulator
                    pltpu.VMEM((Kp, 1), jnp.float32),    # soft-assign sum accumulator
                ],
            ),
            compiler_params=pltpu.CompilerParams(
                dimension_semantics=("parallel", "arbitrary"),
                vmem_limit_bytes=vmem_limit,
            ),
            cost_estimate=cost1,
        )(xf, Wb16, bb_p, Wa16, ba_p, cent_p)

    if hasattr(pl, "Buffered"):
        try:
            vlad = netvlad_call(True)
        except Exception:
            # pipeline_mode=pl.Buffered(1) unsupported by this Pallas build -> fall back to
            # default double-buffered weights (same results, slightly more VMEM).
            vlad = netvlad_call(False)
    else:
        vlad = netvlad_call(False)

    # PCA 1x1 conv + final L2 normalize, with the weight streamed in (TK, dimp) slabs.
    KDpp = Kp * Dp                      # multiple of 1024, so TK=512 always divides it
    TK = min(512, KDpp)
    v16 = vlad.reshape(N, KDpp).astype(jnp.bfloat16)

    cost2 = pl.CostEstimate(
        flops=2 * N * KDpp * dimp, transcendentals=0,
        bytes_accessed=N * KDpp * 2 + KDpp * dimp * 2 + dimp * 4 + N * dimp * 4)

    y = pl.pallas_call(
        pca_kernel,
        out_shape=jax.ShapeDtypeStruct((N, dimp), jnp.float32),
        grid_spec=pltpu.PrefetchScalarGridSpec(
            num_scalar_prefetch=0,
            grid=(KDpp // TK,),
            in_specs=[
                pl.BlockSpec((N, TK), lambda k: (0, k)),      # flattened VLAD slab
                pl.BlockSpec((TK, dimp), lambda k: (k, 0)),   # PCA weight slab (streamed)
                pl.BlockSpec((1, dimp), lambda k: (0, 0)),    # PCA bias
            ],
            out_specs=pl.BlockSpec((N, dimp), lambda k: (0, 0)),
            scratch_shapes=[pltpu.VMEM((N, dimp), jnp.float32)],
        ),
        compiler_params=pltpu.CompilerParams(
            dimension_semantics=("arbitrary",)),
        cost_estimate=cost2,
    )(v16, Wq16, bp_p)

    return y[:, :dim]


# --------------------------------------------------------------------------------- reference
def reference_forward(x, Wb, bb, Wa, ba, cent, Wp, bp):
    """Pure-JAX f32 reference mirroring the PyTorch EmbedNetPCA forward."""
    N, Cin, H, W = x.shape
    P = H * W
    xf = x.reshape(N, Cin, P)
    feats = jnp.einsum('dc,ncp->ndp', Wb, xf) + bb.reshape(1, -1, 1)
    fn = feats / jnp.maximum(
        jnp.sqrt(jnp.sum(feats ** 2, axis=1, keepdims=True)), EPS)
    logits = jnp.einsum('kd,ndp->nkp', Wa, fn) + ba.reshape(1, -1, 1)
    sa = jax.nn.softmax(logits, axis=1)
    agg = jnp.einsum('nkp,ndp->nkd', sa, fn)
    vlad = agg - cent[None] * jnp.sum(sa, axis=2)[:, :, None]
    vlad = vlad / jnp.maximum(
        jnp.sqrt(jnp.sum(vlad ** 2, axis=2, keepdims=True)), EPS)
    v = vlad.reshape(N, -1)
    v = v / jnp.maximum(jnp.sqrt(jnp.sum(v ** 2, axis=1, keepdims=True)), EPS)
    y = v @ Wp.T + bp.reshape(1, -1)
    y = y / jnp.maximum(jnp.sqrt(jnp.sum(y ** 2, axis=1, keepdims=True)), EPS)
    return y


if __name__ == "__main__":
    # Small synthetic shapes consistent with the module:
    #   base_model: Cin -> D feature map, NetVLAD(num_clusters=K, dim=D), PCA dim.
    N, Cin, D, K, PCA_DIM = 2, 4, 16, 8, 64

    key = jax.random.PRNGKey(0)
    ks = jax.random.split(key, 8)
    Wb = jax.random.normal(ks[0], (D, Cin), jnp.float32) * 0.2
    bb = jax.random.normal(ks[1], (D, 1), jnp.float32) * 0.1
    Wa = jax.random.normal(ks[2], (K, D), jnp.float32) * 0.5
    ba = jax.random.normal(ks[3], (K, 1), jnp.float32) * 0.1
    cent = jax.random.normal(ks[4], (K, D), jnp.float32) * 0.5
    Wp = jax.random.normal(ks[5], (PCA_DIM, K * D), jnp.float32) * 0.1
    bp = jax.random.normal(ks[6], (1, PCA_DIM), jnp.float32) * 0.01

    # case 1: 16x16 image, default tile (single 256-pixel tile, no masking).
    x1 = jax.random.normal(ks[7], (N, Cin, 16, 16), jnp.float32)
    out1 = jax.block_until_ready(
        embednet_pca_forward(x1, Wb, bb, Wa, ba, cent, Wp, bp))
    ref1 = jax.block_until_ready(
        reference_forward(x1, Wb, bb, Wa, ba, cent, Wp, bp))
    np.testing.assert_allclose(np.asarray(out1), np.asarray(ref1),
                               rtol=5e-2, atol=2e-2)
    assert out1.shape == (N, PCA_DIM)

    # case 2: 12x12 image (P=144, not a multiple of 128) with tile_p=128 -> exercises
    # multi-tile accumulation and the masked remainder tile.
    x2 = jax.random.normal(jax.random.PRNGKey(1), (N, Cin, 12, 12), jnp.float32)
    out2 = jax.block_until_ready(
        embednet_pca_forward(x2, Wb, bb, Wa, ba, cent, Wp, bp, tile_p=128))
    ref2 = jax.block_until_ready(
        reference_forward(x2, Wb, bb, Wa, ba, cent, Wp, bp))
    np.testing.assert_allclose(np.asarray(out2), np.asarray(ref2),
                               rtol=5e-2, atol=2e-2)
    assert out2.shape == (N, PCA_DIM)

    print("KERNEL_OK")
</pallas_src>

<mosaic_0001>
module attributes {stable_mosaic.version = 11 : i64} {
  func.func @netvlad_kernel(%arg0: i32, %arg1: i32, %arg2: memref<1x16x256xbf16, #tpu.memory_space<vmem>>, %arg3: memref<128x16xbf16, #tpu.memory_space<vmem>>, %arg4: memref<128x1xf32, #tpu.memory_space<vmem>>, %arg5: memref<8x128xbf16, #tpu.memory_space<vmem>>, %arg6: memref<8x1xf32, #tpu.memory_space<vmem>>, %arg7: memref<8x128xf32, #tpu.memory_space<vmem>>, %arg8: memref<1x8x128xf32, #tpu.memory_space<vmem>>, %arg9: memref<8x128xf32, #tpu.memory_space<vmem>>, %arg10: memref<8x1xf32, #tpu.memory_space<vmem>>) attributes {dimension_semantics = [#tpu.dimension_semantics<parallel>, #tpu.dimension_semantics<arbitrary>], iteration_bounds = array<i64: 2, 1>, scalar_prefetch = 0 : i64, scratch_operands = 2 : i64, tpu.core_type = #tpu.core_type<tc>, window_params = [{transform_indices = @transform_0, window_bounds = array<i64: 1, 16, 256>}, {pipeline_mode = #tpu.pipeline_mode<synchronous>, transform_indices = @transform_1, window_bounds = array<i64: 128, 16>}, {pipeline_mode = #tpu.pipeline_mode<synchronous>, transform_indices = @transform_2, window_bounds = array<i64: 128, 1>}, {pipeline_mode = #tpu.pipeline_mode<synchronous>, transform_indices = @transform_3, window_bounds = array<i64: 8, 128>}, {pipeline_mode = #tpu.pipeline_mode<synchronous>, transform_indices = @transform_4, window_bounds = array<i64: 8, 1>}, {pipeline_mode = #tpu.pipeline_mode<synchronous>, transform_indices = @transform_5, window_bounds = array<i64: 8, 128>}, {transform_indices = @transform_6, window_bounds = array<i64: 1, 8, 128>}]} {
    %c0_i32 = arith.constant 0 : i32
    %0 = arith.cmpi eq, %arg1, %c0_i32 : i32
    %1 = arith.extui %0 : i1 to i32
    %c0_i32_0 = arith.constant 0 : i32
    %2 = arith.cmpi ne, %1, %c0_i32_0 : i32
    scf.if %2 {
      %cst_28 = arith.constant 0.000000e+00 : f32
      %47 = vector.broadcast %cst_28 : f32 to vector<8x128xf32>
      %c0_29 = arith.constant 0 : index
      %c0_30 = arith.constant 0 : index
      %48 = vector.load %arg9[%c0_29, %c0_30] : memref<8x128xf32, #tpu.memory_space<vmem>>, vector<8x128xf32>
      tpu.vector_store %arg9[%c0_29, %c0_30], %47 {strides = array<i32>} : memref<8x128xf32, #tpu.memory_space<vmem>>, vector<8x128xf32>,
      %cst_31 = arith.constant 0.000000e+00 : f32
      %49 = vector.broadcast %cst_31 : f32 to vector<8x1xf32>
      %c0_32 = arith.constant 0 : index
      %c0_33 = arith.constant 0 : index
      %50 = vector.load %arg10[%c0_32, %c0_33] : memref<8x1xf32, #tpu.memory_space<vmem>>, vector<8x1xf32>
      tpu.vector_store %arg10[%c0_32, %c0_33], %49 {strides = array<i32>} : memref<8x1xf32, #tpu.memory_space<vmem>>, vector<8x1xf32>,
    } else {
    }
    %c0 = arith.constant 0 : index
    %c0_1 = arith.constant 0 : index
    %c0_2 = arith.constant 0 : index
    %3 = vector.load %arg2[%c0, %c0_1, %c0_2] : memref<1x16x256xbf16, #tpu.memory_space<vmem>>, vector<1x16x256xbf16>
    %4 = vector.shape_cast %3 : vector<1x16x256xbf16> to vector<16x256xbf16>
    %c0_3 = arith.constant 0 : index
    %c0_4 = arith.constant 0 : index
    %5 = vector.load %arg3[%c0_3, %c0_4] : memref<128x16xbf16, #tpu.memory_space<vmem>>, vector<128x16xbf16>
    %cst = arith.constant dense<0.000000e+00> : vector<128x256xf32>
    %6 = tpu.matmul %5, %4, %cst {dimension_numbers = #tpu.dot_dimension_numbers<[1], [0], [0], [1], [0, 0, 1, 1], [], []>} : vector<128x16xbf16>, vector<16x256xbf16>, vector<128x256xf32> -> vector<128x256xf32>
    %c0_5 = arith.constant 0 : index
    %c0_6 = arith.constant 0 : index
    %7 = vector.load %arg4[%c0_5, %c0_6] : memref<128x1xf32, #tpu.memory_space<vmem>>, vector<128x1xf32>
    %8 = vector.broadcast %7 : vector<128x1xf32> to vector<128x256xf32>
    %9 = arith.addf %6, %8 : vector<128x256xf32>
    %10 = arith.mulf %9, %9 : vector<128x256xf32>
    %cst_7 = arith.constant dense<0.000000e+00> : vector<256xf32>
    %11 = vector.multi_reduction <add>, %10, %cst_7 [0] : vector<128x256xf32> to vector<256xf32>
    %12 = vector.shape_cast %11 : vector<256xf32> to vector<1x256xf32>
    %cst_8 = arith.constant 1.000000e-24 : f32
    %13 = vector.broadcast %cst_8 : f32 to vector<1x256xf32>
    %14 = arith.maximumf %12, %13 : vector<1x256xf32>
    %15 = math.rsqrt %14 : vector<1x256xf32>
    %16 = vector.broadcast %15 : vector<1x256xf32> to vector<128x256xf32>
    %17 = arith.mulf %9, %16 : vector<128x256xf32>
    %18 = arith.truncf %17 : vector<128x256xf32> to vector<128x256xbf16>
    %c0_9 = arith.constant 0 : index
    %c0_10 = arith.constant 0 : index
    %19 = vector.load %arg5[%c0_9, %c0_10] : memref<8x128xbf16, #tpu.memory_space<vmem>>, vector<8x128xbf16>
    %cst_11 = arith.constant dense<0.000000e+00> : vector<8x256xf32>
    %20 = tpu.matmul %19, %18, %cst_11 {dimension_numbers = #tpu.dot_dimension_numbers<[1], [0], [0], [1], [0, 0, 1, 1], [], []>} : vector<8x128xbf16>, vector<128x256xbf16>, vector<8x256xf32> -> vector<8x256xf32>
    %c0_12 = arith.constant 0 : index
    %c0_13 = arith.constant 0 : index
    %21 = vector.load %arg6[%c0_12, %c0_13] : memref<8x1xf32, #tpu.memory_space<vmem>>, vector<8x1xf32>
    %22 = vector.broadcast %21 : vector<8x1xf32> to vector<8x256xf32>
    %23 = arith.addf %20, %22 : vector<8x256xf32>
    %cst_14 = arith.constant dense<0xFF800000> : vector<256xf32>
    %24 = vector.multi_reduction <maximumf>, %23, %cst_14 [0] : vector<8x256xf32> to vector<256xf32>
    %25 = vector.shape_cast %24 : vector<256xf32> to vector<1x256xf32>
    %26 = vector.broadcast %25 : vector<1x256xf32> to vector<8x256xf32>
    %27 = arith.subf %23, %26 : vector<8x256xf32>
    %28 = math.exp %27 : vector<8x256xf32>
    %cst_15 = arith.constant dense<0.000000e+00> : vector<256xf32>
    %29 = vector.multi_reduction <add>, %28, %cst_15 [0] : vector<8x256xf32> to vector<256xf32>
    %30 = vector.shape_cast %29 : vector<256xf32> to vector<1x256xf32>
    %31 = tpu.reciprocal %30 : vector<1x256xf32> -> vector<1x256xf32>
    %32 = vector.broadcast %31 : vector<1x256xf32> to vector<8x256xf32>
    %33 = arith.mulf %28, %32 : vector<8x256xf32>
    %c0_16 = arith.constant 0 : index
    %c0_17 = arith.constant 0 : index
    %34 = vector.load %arg9[%c0_16, %c0_17] : memref<8x128xf32, #tpu.memory_space<vmem>>, vector<8x128xf32>
    %35 = arith.truncf %33 : vector<8x256xf32> to vector<8x256xbf16>
    %cst_18 = arith.constant dense<0.000000e+00> : vector<8x128xf32>
    %36 = tpu.matmul %35, %18, %cst_18 {dimension_numbers = #tpu.dot_dimension_numbers<[1], [1], [0], [0], [0, 0, 1, 0], [], []>} : vector<8x256xbf16>, vector<128x256xbf16>, vector<8x128xf32> -> vector<8x128xf32>
    %37 = arith.addf %34, %36 : vector<8x128xf32>
    %c0_19 = arith.constant 0 : index
    %c0_20 = arith.constant 0 : index
    %38 = vector.load %arg9[%c0_19, %c0_20] : memref<8x128xf32, #tpu.memory_space<vmem>>, vector<8x128xf32>
    tpu.vector_store %arg9[%c0_19, %c0_20], %37 {strides = array<i32>} : memref<8x128xf32, #tpu.memory_space<vmem>>, vector<8x128xf32>,
    %c0_21 = arith.constant 0 : index
    %c0_22 = arith.constant 0 : index
    %39 = vector.load %arg10[%c0_21, %c0_22] : memref<8x1xf32, #tpu.memory_space<vmem>>, vector<8x1xf32>
    %cst_23 = arith.constant dense<0.000000e+00> : vector<8xf32>
    %40 = vector.multi_reduction <add>, %33, %cst_23 [1] : vector<8x256xf32> to vector<8xf32>
    %41 = vector.shape_cast %40 : vector<8xf32> to vector<8x1xf32>
    %42 = arith.addf %39, %41 : vector<8x1xf32>
    %c0_24 = arith.constant 0 : index
    %c0_25 = arith.constant 0 : index
    %43 = vector.load %arg10[%c0_24, %c0_25] : memref<8x1xf32, #tpu.memory_space<vmem>>, vector<8x1xf32>
    tpu.vector_store %arg10[%c0_24, %c0_25], %42 {strides = array<i32>} : memref<8x1xf32, #tpu.memory_space<vmem>>, vector<8x1xf32>,
    %c0_i32_26 = arith.constant 0 : i32
    %44 = arith.cmpi eq, %arg1, %c0_i32_26 : i32
    %45 = arith.extui %44 : i1 to i32
    %c0_i32_27 = arith.constant 0 : i32
    %46 = arith.cmpi ne, %45, %c0_i32_27 : i32
    scf.if %46 {
      %c0_28 = arith.constant 0 : index
      %c0_29 = arith.constant 0 : index
      %47 = vector.load %arg9[%c0_28, %c0_29] : memref<8x128xf32, #tpu.memory_space<vmem>>, vector<8x128xf32>
      %c0_30 = arith.constant 0 : index
      %c0_31 = arith.constant 0 : index
      %48 = vector.load %arg7[%c0_30, %c0_31] : memref<8x128xf32, #tpu.memory_space<vmem>>, vector<8x128xf32>
      %c0_32 = arith.constant 0 : index
      %c0_33 = arith.constant 0 : index
      %49 = vector.load %arg10[%c0_32, %c0_33] : memref<8x1xf32, #tpu.memory_space<vmem>>, vector<8x1xf32>
      %50 = vector.broadcast %49 : vector<8x1xf32> to vector<8x128xf32>
      %51 = arith.mulf %48, %50 : vector<8x128xf32>
      %52 = arith.subf %47, %51 : vector<8x128xf32>
      %53 = arith.mulf %52, %52 : vector<8x128xf32>
      %cst_34 = arith.constant dense<0.000000e+00> : vector<8xf32>
      %54 = vector.multi_reduction <add>, %53, %cst_34 [1] : vector<8x128xf32> to vector<8xf32>
      %55 = vector.shape_cast %54 : vector<8xf32> to vector<8x1xf32>
      %cst_35 = arith.constant 1.000000e-24 : f32
      %56 = vector.broadcast %cst_35 : f32 to vector<8x1xf32>
      %57 = arith.maximumf %55, %56 : vector<8x1xf32>
      %58 = math.rsqrt %57 : vector<8x1xf32>
      %59 = vector.broadcast %58 : vector<8x1xf32> to vector<8x128xf32>
      %60 = arith.mulf %52, %59 : vector<8x128xf32>
      %61 = arith.mulf %60, %60 : vector<8x128xf32>
      %62 = vector.shape_cast %61 : vector<8x128xf32> to vector<1x8x128xf32>
      %cst_36 = arith.constant dense<0.000000e+00> : vector<1xf32>
      %63 = vector.multi_reduction <add>, %62, %cst_36 [1, 2] : vector<1x8x128xf32> to vector<1xf32>
      %64 = vector.shape_cast %63 : vector<1xf32> to vector<1x1x1xf32>
      %65 = vector.extract %64[0, 0, 0] : f32 from vector<1x1x1xf32>
      %cst_37 = arith.constant 1.000000e-24 : f32
      %66 = arith.maximumf %65, %cst_37 : f32
      %67 = math.rsqrt %66 : f32
      %68 = vector.broadcast %67 : f32 to vector<8x128xf32>
      %69 = arith.mulf %60, %68 : vector<8x128xf32>
      %c0_38 = arith.constant 0 : index
      %c0_39 = arith.constant 0 : index
      %c0_40 = arith.constant 0 : index
      %70 = vector.load %arg8[%c0_38, %c0_39, %c0_40] : memref<1x8x128xf32, #tpu.memory_space<vmem>>, vector<1x8x128xf32>
      %71 = vector.shape_cast %70 : vector<1x8x128xf32> to vector<8x128xf32>
      %72 = vector.shape_cast %69 : vector<8x128xf32> to vector<1x8x128xf32>
      tpu.vector_store %arg8[%c0_38, %c0_39, %c0_40], %72 {strides = array<i32>} : memref<1x8x128xf32, #tpu.memory_space<vmem>>, vector<1x8x128xf32>,
    } else {
    }
    return
  }
  func.func @transform_0(%arg0: i32, %arg1: i32) -> (i32, i32, i32) {
    %c0_i32 = arith.constant 0 : i32
    %c0_i32_0 = arith.constant 0 : i32
    return %arg0, %c0_i32, %arg1 : i32, i32, i32
  }
  func.func @transform_1(%arg0: i32, %arg1: i32) -> (i32, i32) {
    %c0_i32 = arith.constant 0 : i32
    %c0_i32_0 = arith.constant 0 : i32
    %c0_i32_1 = arith.constant 0 : i32
    return %c0_i32, %c0_i32_0 : i32, i32
  }
  func.func @transform_2(%arg0: i32, %arg1: i32) -> (i32, i32) {
    %c0_i32 = arith.constant 0 : i32
    %c0_i32_0 = arith.constant 0 : i32
    %c0_i32_1 = arith.constant 0 : i32
    return %c0_i32, %c0_i32_0 : i32, i32
  }
  func.func @transform_3(%arg0: i32, %arg1: i32) -> (i32, i32) {
    %c0_i32 = arith.constant 0 : i32
    %c0_i32_0 = arith.constant 0 : i32
    %c0_i32_1 = arith.constant 0 : i32
    return %c0_i32, %c0_i32_0 : i32, i32
  }
  func.func @transform_4(%arg0: i32, %arg1: i32) -> (i32, i32) {
    %c0_i32 = arith.constant 0 : i32
    %c0_i32_0 = arith.constant 0 : i32
    %c0_i32_1 = arith.constant 0 : i32
    return %c0_i32, %c0_i32_0 : i32, i32
  }
  func.func @transform_5(%arg0: i32, %arg1: i32) -> (i32, i32) {
    %c0_i32 = arith.constant 0 : i32
    %c0_i32_0 = arith.constant 0 : i32
    %c0_i32_1 = arith.constant 0 : i32
    return %c0_i32, %c0_i32_0 : i32, i32
  }
  func.func @transform_6(%arg0: i32, %arg1: i32) -> (i32, i32, i32) {
    %c0_i32 = arith.constant 0 : i32
    %c0_i32_0 = arith.constant 0 : i32
    %c0_i32_1 = arith.constant 0 : i32
    return %arg0, %c0_i32, %c0_i32_0 : i32, i32, i32
  }
}

module attributes {stable_mosaic.version = 11 : i64} {
  func.func @netvlad_kernel(%arg0: i32, %arg1: i32, %arg2: memref<1x16x256xbf16, #tpu.memory_space<vmem>>, %arg3: memref<128x16xbf16, #tpu.memory_space<vmem>>, %arg4: memref<128x1xf32, #tpu.memory_space<vmem>>, %arg5: memref<8x128xbf16, #tpu.memory_space<vmem>>, %arg6: memref<8x1xf32, #tpu.memory_space<vmem>>, %arg7: memref<8x128xf32, #tpu.memory_space<vmem>>, %arg8: memref<1x8x128xf32, #tpu.memory_space<vmem>>, %arg9: memref<8x128xf32, #tpu.memory_space<vmem>>, %arg10: memref<8x1xf32, #tpu.memory_space<vmem>>) attributes {dimension_semantics = [#tpu.dimension_semantics<parallel>, #tpu.dimension_semantics<arbitrary>], iteration_bounds = array<i64: 2, 1>, scalar_prefetch = 0 : i64, scratch_operands = 2 : i64, tpu.core_type = #tpu.core_type<tc>, window_params = [{transform_indices = @transform_0, window_bounds = array<i64: 1, 16, 256>}, {pipeline_mode = #tpu.pipeline_mode<synchronous>, transform_indices = @transform_1, window_bounds = array<i64: 128, 16>}, {pipeline_mode = #tpu.pipeline_mode<synchronous>, transform_indices = @transform_2, window_bounds = array<i64: 128, 1>}, {pipeline_mode = #tpu.pipeline_mode<synchronous>, transform_indices = @transform_3, window_bounds = array<i64: 8, 128>}, {pipeline_mode = #tpu.pipeline_mode<synchronous>, transform_indices = @transform_4, window_bounds = array<i64: 8, 1>}, {pipeline_mode = #tpu.pipeline_mode<synchronous>, transform_indices = @transform_5, window_bounds = array<i64: 8, 128>}, {transform_indices = @transform_6, window_bounds = array<i64: 1, 8, 128>}]} {
    %c0_i32 = arith.constant 0 : i32
    %0 = arith.cmpi eq, %arg1, %c0_i32 : i32
    %1 = arith.extui %0 : i1 to i32
    %c0_i32_0 = arith.constant 0 : i32
    %2 = arith.cmpi ne, %1, %c0_i32_0 : i32
    scf.if %2 {
      %cst_28 = arith.constant 0.000000e+00 : f32
      %47 = vector.broadcast %cst_28 : f32 to vector<8x128xf32>
      %c0_29 = arith.constant 0 : index
      %c0_30 = arith.constant 0 : index
      %48 = vector.load %arg9[%c0_29, %c0_30] : memref<8x128xf32, #tpu.memory_space<vmem>>, vector<8x128xf32>
      tpu.vector_store %arg9[%c0_29, %c0_30], %47 {strides = array<i32>} : memref<8x128xf32, #tpu.memory_space<vmem>>, vector<8x128xf32>,
      %cst_31 = arith.constant 0.000000e+00 : f32
      %49 = vector.broadcast %cst_31 : f32 to vector<8x1xf32>
      %c0_32 = arith.constant 0 : index
      %c0_33 = arith.constant 0 : index
      %50 = vector.load %arg10[%c0_32, %c0_33] : memref<8x1xf32, #tpu.memory_space<vmem>>, vector<8x1xf32>
      tpu.vector_store %arg10[%c0_32, %c0_33], %49 {strides = array<i32>} : memref<8x1xf32, #tpu.memory_space<vmem>>, vector<8x1xf32>,
    } else {
    }
    %c0 = arith.constant 0 : index
    %c0_1 = arith.constant 0 : index
    %c0_2 = arith.constant 0 : index
    %3 = vector.load %arg2[%c0, %c0_1, %c0_2] : memref<1x16x256xbf16, #tpu.memory_space<vmem>>, vector<1x16x256xbf16>
    %4 = vector.shape_cast %3 : vector<1x16x256xbf16> to vector<16x256xbf16>
    %c0_3 = arith.constant 0 : index
    %c0_4 = arith.constant 0 : index
    %5 = vector.load %arg3[%c0_3, %c0_4] : memref<128x16xbf16, #tpu.memory_space<vmem>>, vector<128x16xbf16>
    %cst = arith.constant dense<0.000000e+00> : vector<128x256xf32>
    %6 = tpu.matmul %5, %4, %cst {dimension_numbers = #tpu.dot_dimension_numbers<[1], [0], [0], [1], [0, 0, 1, 1], [], []>} : vector<128x16xbf16>, vector<16x256xbf16>, vector<128x256xf32> -> vector<128x256xf32>
    %c0_5 = arith.constant 0 : index
    %c0_6 = arith.constant 0 : index
    %7 = vector.load %arg4[%c0_5, %c0_6] : memref<128x1xf32, #tpu.memory_space<vmem>>, vector<128x1xf32>
    %8 = vector.broadcast %7 : vector<128x1xf32> to vector<128x256xf32>
    %9 = arith.addf %6, %8 : vector<128x256xf32>
    %10 = arith.mulf %9, %9 : vector<128x256xf32>
    %cst_7 = arith.constant dense<0.000000e+00> : vector<256xf32>
    %11 = vector.multi_reduction <add>, %10, %cst_7 [0] : vector<128x256xf32> to vector<256xf32>
    %12 = vector.shape_cast %11 : vector<256xf32> to vector<1x256xf32>
    %cst_8 = arith.constant 1.000000e-24 : f32
    %13 = vector.broadcast %cst_8 : f32 to vector<1x256xf32>
    %14 = arith.maximumf %12, %13 : vector<1x256xf32>
    %15 = math.rsqrt %14 : vector<1x256xf32>
    %16 = vector.broadcast %15 : vector<1x256xf32> to vector<128x256xf32>
    %17 = arith.mulf %9, %16 : vector<128x256xf32>
    %18 = arith.truncf %17 : vector<128x256xf32> to vector<128x256xbf16>
    %c0_9 = arith.constant 0 : index
    %c0_10 = arith.constant 0 : index
    %19 = vector.load %arg5[%c0_9, %c0_10] : memref<8x128xbf16, #tpu.memory_space<vmem>>, vector<8x128xbf16>
    %cst_11 = arith.constant dense<0.000000e+00> : vector<8x256xf32>
    %20 = tpu.matmul %19, %18, %cst_11 {dimension_numbers = #tpu.dot_dimension_numbers<[1], [0], [0], [1], [0, 0, 1, 1], [], []>} : vector<8x128xbf16>, vector<128x256xbf16>, vector<8x256xf32> -> vector<8x256xf32>
    %c0_12 = arith.constant 0 : index
    %c0_13 = arith.constant 0 : index
    %21 = vector.load %arg6[%c0_12, %c0_13] : memref<8x1xf32, #tpu.memory_space<vmem>>, vector<8x1xf32>
    %22 = vector.broadcast %21 : vector<8x1xf32> to vector<8x256xf32>
    %23 = arith.addf %20, %22 : vector<8x256xf32>
    %cst_14 = arith.constant dense<0xFF800000> : vector<256xf32>
    %24 = vector.multi_reduction <maximumf>, %23, %cst_14 [0] : vector<8x256xf32> to vector<256xf32>
    %25 = vector.shape_cast %24 : vector<256xf32> to vector<1x256xf32>
    %26 = vector.broadcast %25 : vector<1x256xf32> to vector<8x256xf32>
    %27 = arith.subf %23, %26 : vector<8x256xf32>
    %28 = math.exp %27 : vector<8x256xf32>
    %cst_15 = arith.constant dense<0.000000e+00> : vector<256xf32>
    %29 = vector.multi_reduction <add>, %28, %cst_15 [0] : vector<8x256xf32> to vector<256xf32>
    %30 = vector.shape_cast %29 : vector<256xf32> to vector<1x256xf32>
    %31 = tpu.reciprocal %30 : vector<1x256xf32> -> vector<1x256xf32>
    %32 = vector.broadcast %31 : vector<1x256xf32> to vector<8x256xf32>
    %33 = arith.mulf %28, %32 : vector<8x256xf32>
    %c0_16 = arith.constant 0 : index
    %c0_17 = arith.constant 0 : index
    %34 = vector.load %arg9[%c0_16, %c0_17] : memref<8x128xf32, #tpu.memory_space<vmem>>, vector<8x128xf32>
    %35 = arith.truncf %33 : vector<8x256xf32> to vector<8x256xbf16>
    %cst_18 = arith.constant dense<0.000000e+00> : vector<8x128xf32>
    %36 = tpu.matmul %35, %18, %cst_18 {dimension_numbers = #tpu.dot_dimension_numbers<[1], [1], [0], [0], [0, 0, 1, 0], [], []>} : vector<8x256xbf16>, vector<128x256xbf16>, vector<8x128xf32> -> vector<8x128xf32>
    %37 = arith.addf %34, %36 : vector<8x128xf32>
    %c0_19 = arith.constant 0 : index
    %c0_20 = arith.constant 0 : index
    %38 = vector.load %arg9[%c0_19, %c0_20] : memref<8x128xf32, #tpu.memory_space<vmem>>, vector<8x128xf32>
    tpu.vector_store %arg9[%c0_19, %c0_20], %37 {strides = array<i32>} : memref<8x128xf32, #tpu.memory_space<vmem>>, vector<8x128xf32>,
    %c0_21 = arith.constant 0 : index
    %c0_22 = arith.constant 0 : index
    %39 = vector.load %arg10[%c0_21, %c0_22] : memref<8x1xf32, #tpu.memory_space<vmem>>, vector<8x1xf32>
    %cst_23 = arith.constant dense<0.000000e+00> : vector<8xf32>
    %40 = vector.multi_reduction <add>, %33, %cst_23 [1] : vector<8x256xf32> to vector<8xf32>
    %41 = vector.shape_cast %40 : vector<8xf32> to vector<8x1xf32>
    %42 = arith.addf %39, %41 : vector<8x1xf32>
    %c0_24 = arith.constant 0 : index
    %c0_25 = arith.constant 0 : index
    %43 = vector.load %arg10[%c0_24, %c0_25] : memref<8x1xf32, #tpu.memory_space<vmem>>, vector<8x1xf32>
    tpu.vector_store %arg10[%c0_24, %c0_25], %42 {strides = array<i32>} : memref<8x1xf32, #tpu.memory_space<vmem>>, vector<8x1xf32>,
    %c0_i32_26 = arith.constant 0 : i32
    %44 = arith.cmpi eq, %arg1, %c0_i32_26 : i32
    %45 = arith.extui %44 : i1 to i32
    %c0_i32_27 = arith.constant 0 : i32
    %46 = arith.cmpi ne, %45, %c0_i32_27 : i32
    scf.if %46 {
      %c0_28 = arith.constant 0 : index
      %c0_29 = arith.constant 0 : index
      %47 = vector.load %arg9[%c0_28, %c0_29] : memref<8x128xf32, #tpu.memory_space<vmem>>, vector<8x128xf32>
      %c0_30 = arith.constant 0 : index
      %c0_31 = arith.constant 0 : index
      %48 = vector.load %arg7[%c0_30, %c0_31] : memref<8x128xf32, #tpu.memory_space<vmem>>, vector<8x128xf32>
      %c0_32 = arith.constant 0 : index
      %c0_33 = arith.constant 0 : index
      %49 = vector.load %arg10[%c0_32, %c0_33] : memref<8x1xf32, #tpu.memory_space<vmem>>, vector<8x1xf32>
      %50 = vector.broadcast %49 : vector<8x1xf32> to vector<8x128xf32>
      %51 = arith.mulf %48, %50 : vector<8x128xf32>
      %52 = arith.subf %47, %51 : vector<8x128xf32>
      %53 = arith.mulf %52, %52 : vector<8x128xf32>
      %cst_34 = arith.constant dense<0.000000e+00> : vector<8xf32>
      %54 = vector.multi_reduction <add>, %53, %cst_34 [1] : vector<8x128xf32> to vector<8xf32>
      %55 = vector.shape_cast %54 : vector<8xf32> to vector<8x1xf32>
      %cst_35 = arith.constant 1.000000e-24 : f32
      %56 = vector.broadcast %cst_35 : f32 to vector<8x1xf32>
      %57 = arith.maximumf %55, %56 : vector<8x1xf32>
      %58 = math.rsqrt %57 : vector<8x1xf32>
      %59 = vector.broadcast %58 : vector<8x1xf32> to vector<8x128xf32>
      %60 = arith.mulf %52, %59 : vector<8x128xf32>
      %61 = arith.mulf %60, %60 : vector<8x128xf32>
      %62 = vector.shape_cast %61 : vector<8x128xf32> to vector<1x8x128xf32>
      %cst_36 = arith.constant dense<0.000000e+00> : vector<1xf32>
      %63 = vector.multi_reduction <add>, %62, %cst_36 [1, 2] : vector<1x8x128xf32> to vector<1xf32>
      %64 = vector.shape_cast %63 : vector<1xf32> to vector<1x1x1xf32>
      %65 = vector.extract %64[0, 0, 0] : f32 from vector<1x1x1xf32>
      %cst_37 = arith.constant 1.000000e-24 : f32
      %66 = arith.maximumf %65, %cst_37 : f32
      %67 = math.rsqrt %66 : f32
      %68 = vector.broadcast %67 : f32 to vector<8x128xf32>
      %69 = arith.mulf %60, %68 : vector<8x128xf32>
      %c0_38 = arith.constant 0 : index
      %c0_39 = arith.constant 0 : index
      %c0_40 = arith.constant 0 : index
      %70 = vector.load %arg8[%c0_38, %c0_39, %c0_40] : memref<1x8x128xf32, #tpu.memory_space<vmem>>, vector<1x8x128xf32>
      %71 = vector.shape_cast %70 : vector<1x8x128xf32> to vector<8x128xf32>
      %72 = vector.shape_cast %69 : vector<8x128xf32> to vector<1x8x128xf32>
      tpu.vector_store %arg8[%c0_38, %c0_39, %c0_40], %72 {strides = array<i32>} : memref<1x8x128xf32, #tpu.memory_space<vmem>>, vector<1x8x128xf32>,
    } else {
    }
    return
  }
  func.func @transform_0(%arg0: i32, %arg1: i32) -> (i32, i32, i32) {
    %c0_i32 = arith.constant 0 : i32
    %c0_i32_0 = arith.constant 0 : i32
    return %arg0, %c0_i32, %arg1 : i32, i32, i32
  }
  func.func @transform_1(%arg0: i32, %arg1: i32) -> (i32, i32) {
    %c0_i32 = arith.constant 0 : i32
    %c0_i32_0 = arith.constant 0 : i32
    %c0_i32_1 = arith.constant 0 : i32
    return %c0_i32, %c0_i32_0 : i32, i32
  }
  func.func @transform_2(%arg0: i32, %arg1: i32) -> (i32, i32) {
    %c0_i32 = arith.constant 0 : i32
    %c0_i32_0 = arith.constant 0 : i32
    %c0_i32_1 = arith.constant 0 : i32
    return %c0_i32, %c0_i32_0 : i32, i32
  }
  func.func @transform_3(%arg0: i32, %arg1: i32) -> (i32, i32) {
    %c0_i32 = arith.constant 0 : i32
    %c0_i32_0 = arith.constant 0 : i32
    %c0_i32_1 = arith.constant 0 : i32
    return %c0_i32, %c0_i32_0 : i32, i32
  }
  func.func @transform_4(%arg0: i32, %arg1: i32) -> (i32, i32) {
    %c0_i32 = arith.constant 0 : i32
    %c0_i32_0 = arith.constant 0 : i32
    %c0_i32_1 = arith.constant 0 : i32
    return %c0_i32, %c0_i32_0 : i32, i32
  }
  func.func @transform_5(%arg0: i32, %arg1: i32) -> (i32, i32) {
    %c0_i32 = arith.constant 0 : i32
    %c0_i32_0 = arith.constant 0 : i32
    %c0_i32_1 = arith.constant 0 : i32
    return %c0_i32, %c0_i32_0 : i32, i32
  }
  func.func @transform_6(%arg0: i32, %arg1: i32) -> (i32, i32, i32) {
    %c0_i32 = arith.constant 0 : i32
    %c0_i32_0 = arith.constant 0 : i32
    %c0_i32_1 = arith.constant 0 : i32
    return %arg0, %c0_i32, %c0_i32_0 : i32, i32, i32
  }
}

</mosaic_0001>

<llo_original>
// kernel: tpu_custom_call.1
$region0: #{tpu_custom_call.1}
  #allocation0 [shape = 'u32[]', space=smem, size = 0x4, offset = 0x4, fixed_abs, tag = 'smem constant byte address 0x4 - core index']
  #allocation1 [shape = 'u32[144,128]{1,0:T(1,128)}', space=vmem, size = 0x12000, scoped, tag = 'internal scratch']
  #allocation2 [shape = 'f32[8,128]{1,0:T(8,128)}', space=vmem, size = 0x1000, scoped, tag = 'scratch operand']
  #allocation3 [shape = 'f32[8,1]{1,0:T(8,128)}', space=vmem, size = 0x1000, scoped, tag = 'scratch operand']
  %s0 = inlined_call_operand.vmem [shape: bf16[2,16,256], index: 0, kind: input, shape index: {}]
  %s1 = inlined_call_operand.vmem [shape: bf16[128,16], index: 1, kind: input, shape index: {}]
  %s2 = inlined_call_operand.vmem [shape: f32[128,1], index: 2, kind: input, shape index: {}]
  %s3 = inlined_call_operand.vmem [shape: bf16[8,128], index: 3, kind: input, shape index: {}]
  %s4 = inlined_call_operand.vmem [shape: f32[8,1], index: 4, kind: input, shape index: {}]
  %s5 = inlined_call_operand.vmem [shape: f32[8,128], index: 5, kind: input, shape index: {}]
  %s6 = inlined_call_operand.hbm [shape: f32[2,8,128], index: 6, kind: output, shape index: {}]
  %s7 = sld [smem:[#allocation0]]
  $region65: #{tpu_custom_call.1} parent=0
    _
  %s9 = ssub.s32 1, %s7
  %s10 = scalar_select 0, %s9, %s7
  $region1: #{tpu_custom_call.1} parent=0
    #allocation4 [shape = 'u8[8192]{0}', space=vmem, size = 0x2000, scoped, tag = 'output window, operand 0']
    #allocation5 [shape = 's32[2]{0}', space=sflag, size = 0x8, scoped, tag = 'scoped memory for tpu_custom_call.1']
    %11 = vsyncpa [#allocation5], 0
    %s12 = scalar_lea.sflag [#allocation5], 1
    %13 = vsyncpa %s12, 0
    loop: start=0, step=1, limit=4
    $region2: #{tpu_custom_call.1} parent=1 // loop_pre_header
      _
    $region3: #{tpu_custom_call.1} parent=1 // loop_header
      %s15 = sphi 0, %s19
      %p16 = scmp.ge.s32.totalorder %s15, 4
      %s22 = sphi 0, %s34
      %s23 = sphi 0, %s30
      %s24 = sphi 0, %s22
      %s25 = sphi 0, %s23
      %s26 = sphi 0, %s24
      %s27 = sphi 0, %s25
      %s39 = sphi 0, %s41
      %s42 = sphi 0, %s39
      %s43 = sphi 0, %s42
      %s59 = sphi 0, %s43
      %s63 = sphi 0, %s63
      %s65 = sphi 0, %s63
      %s66 = sphi 0, %s65
      %s80 = sphi 0, %s66
      %s84 = sphi 0, %s84
      %s86 = sphi 0, %s84
      %s87 = sphi 0, %s86
      %s101 = sphi 0, %s87
      %s105 = sphi 0, %s105
      %s107 = sphi 0, %s105
      %s108 = sphi 0, %s107
      %s122 = sphi 0, %s108
      %s126 = sphi 0, %s126
      %s128 = sphi 0, %s126
      %s129 = sphi 0, %s128
      %s143 = sphi 0, %s129
      %s147 = sphi 0, %s147
      %s149 = sphi 0, %s147
      %s150 = sphi 0, %s149
      %s164 = sphi 0, %s150
      %s170 = sphi 0, %s172
      %s173 = sphi 0, %s170
      %s174 = sphi 0, %s173
      %s190 = sphi 0, %s174
    $region4: #{tpu_custom_call.1} parent=1 // loop_header_branch
      %18 = sbr.rel (%p16) target = $region8
    $region5: #{tpu_custom_call.1} parent=1 // loop_body
      %s20 = ssub.s32 %s15, 1
      %s21 = ssub.s32 %s15, 2
      %s28 = sadd.s32 1, %s23
      %p29 = scmp.ge.s32.totalorder %s28, 1
      %s30 = scalar_select %p29, 0, %s28
      %s31 = sadd.s32 1, %s22
      %s32 = scalar_select %p29, %s31, %s22
      %p33 = scmp.ge.s32.totalorder %s32, 2
      %s34 = scalar_select %p33, 0, %s32
      %s35 = ssub.s32 %s22, %s34
      %s36 = ssub.s32 %s23, %s30
      %s37 = sor.u32 %s35, %s36
      %p38 = scmp.eq.s32.totalorder %s37, 0
      %s40 = sadd.s32 %s39, 1
      %s41 = scalar_select %p38, %s39, %s40
      %p44 = pneg %p38
      %p45 = scmp.eq.s32.totalorder %s15, 1
      %p46 = por %p44, %p45
      %p47 = scmp.ne.s32.totalorder %s39, %s42
      %p48 = scmp.eq.s32.totalorder %s15, 0
      %p49 = por %p47, %p48
      %p50 = scmp.ne.s32.totalorder %s39, %s42
      %p51 = scmp.eq.s32.totalorder %s20, 1
      %p52 = por %p50, %p51
      %p53 = scmp.ne.s32.totalorder %s42, %s43
      %p54 = scmp.eq.s32.totalorder %s20, 0
      %p55 = por %p53, %p54
      %p56 = scmp.ne.s32.totalorder %s42, %s43
      %p57 = scmp.eq.s32.totalorder %s21, 1
      %p58 = por %p56, %p57
      %p60 = scmp.ne.s32.totalorder %s43, %s59
      %p61 = scmp.eq.s32.totalorder %s21, 0
      %p62 = por %p60, %p61
      %s64 = sadd.s32 %s63, 1
      %p67 = scmp.eq.s32.totalorder %s15, 1
      %p68 = scmp.ne.s32.totalorder %s63, %s65
      %p69 = scmp.eq.s32.totalorder %s15, 0
      %p70 = por %p68, %p69
      %p71 = scmp.ne.s32.totalorder %s63, %s65
      %p72 = scmp.eq.s32.totalorder %s20, 1
      %p73 = por %p71, %p72
      %p74 = scmp.ne.s32.totalorder %s65, %s66
      %p75 = scmp.eq.s32.totalorder %s20, 0
      %p76 = por %p74, %p75
      %p77 = scmp.ne.s32.totalorder %s65, %s66
      %p78 = scmp.eq.s32.totalorder %s21, 1
      %p79 = por %p77, %p78
      %p81 = scmp.ne.s32.totalorder %s66, %s80
      %p82 = scmp.eq.s32.totalorder %s21, 0
      %p83 = por %p81, %p82
      %s85 = sadd.s32 %s84, 1
      %p88 = scmp.eq.s32.totalorder %s15, 1
      %p89 = scmp.ne.s32.totalorder %s84, %s86
      %p90 = scmp.eq.s32.totalorder %s15, 0
      %p91 = por %p89, %p90
      %p92 = scmp.ne.s32.totalorder %s84, %s86
      %p93 = scmp.eq.s32.totalorder %s20, 1
      %p94 = por %p92, %p93
      %p95 = scmp.ne.s32.totalorder %s86, %s87
      %p96 = scmp.eq.s32.totalorder %s20, 0
      %p97 = por %p95, %p96
      %p98 = scmp.ne.s32.totalorder %s86, %s87
      %p99 = scmp.eq.s32.totalorder %s21, 1
      %p100 = por %p98, %p99
      %p102 = scmp.ne.s32.totalorder %s87, %s101
      %p103 = scmp.eq.s32.totalorder %s21, 0
      %p104 = por %p102, %p103
      %s106 = sadd.s32 %s105, 1
      %p109 = scmp.eq.s32.totalorder %s15, 1
      %p110 = scmp.ne.s32.totalorder %s105, %s107
      %p111 = scmp.eq.s32.totalorder %s15, 0
      %p112 = por %p110, %p111
      %p113 = scmp.ne.s32.totalorder %s105, %s107
      %p114 = scmp.eq.s32.totalorder %s20, 1
      %p115 = por %p113, %p114
      %p116 = scmp.ne.s32.totalorder %s107, %s108
      %p117 = scmp.eq.s32.totalorder %s20, 0
      %p118 = por %p116, %p117
      %p119 = scmp.ne.s32.totalorder %s107, %s108
      %p120 = scmp.eq.s32.totalorder %s21, 1
      %p121 = por %p119, %p120
      %p123 = scmp.ne.s32.totalorder %s108, %s122
      %p124 = scmp.eq.s32.totalorder %s21, 0
      %p125 = por %p123, %p124
      %s127 = sadd.s32 %s126, 1
      %p130 = scmp.eq.s32.totalorder %s15, 1
      %p131 = scmp.ne.s32.totalorder %s126, %s128
      %p132 = scmp.eq.s32.totalorder %s15, 0
      %p133 = por %p131, %p132
      %p134 = scmp.ne.s32.totalorder %s126, %s128
      %p135 = scmp.eq.s32.totalorder %s20, 1
      %p136 = por %p134, %p135
      %p137 = scmp.ne.s32.totalorder %s128, %s129
      %p138 = scmp.eq.s32.totalorder %s20, 0
      %p139 = por %p137, %p138
      %p140 = scmp.ne.s32.totalorder %s128, %s129
      %p141 = scmp.eq.s32.totalorder %s21, 1
      %p142 = por %p140, %p141
      %p144 = scmp.ne.s32.totalorder %s129, %s143
      %p145 = scmp.eq.s32.totalorder %s21, 0
      %p146 = por %p144, %p145
      %s148 = sadd.s32 %s147, 1
      %p151 = scmp.eq.s32.totalorder %s15, 1
      %p152 = scmp.ne.s32.totalorder %s147, %s149
      %p153 = scmp.eq.s32.totalorder %s15, 0
      %p154 = por %p152, %p153
      %p155 = scmp.ne.s32.totalorder %s147, %s149
      %p156 = scmp.eq.s32.totalorder %s20, 1
      %p157 = por %p155, %p156
      %p158 = scmp.ne.s32.totalorder %s149, %s150
      %p159 = scmp.eq.s32.totalorder %s20, 0
      %p160 = por %p158, %p159
      %p161 = scmp.ne.s32.totalorder %s149, %s150
      %p162 = scmp.eq.s32.totalorder %s21, 1
      %p163 = por %p161, %p162
      %p165 = scmp.ne.s32.totalorder %s150, %s164
      %p166 = scmp.eq.s32.totalorder %s21, 0
      %p167 = por %p165, %p166
      %s168 = ssub.s32 %s22, %s34
      %p169 = scmp.eq.s32.totalorder %s168, 0
      %s171 = sadd.s32 %s170, 1
      %s172 = scalar_select %p169, %s170, %s171
      %p175 = pneg %p169
      %p176 = scmp.eq.s32.totalorder %s15, 1
      %p177 = por %p175, %p176
      %p178 = scmp.ne.s32.totalorder %s170, %s173
      %p179 = scmp.eq.s32.totalorder %s15, 0
      %p180 = por %p178, %p179
      %p181 = scmp.ne.s32.totalorder %s170, %s173
      %p182 = scmp.eq.s32.totalorder %s20, 1
      %p183 = por %p181, %p182
      %p184 = scmp.ne.s32.totalorder %s173, %s174
      %p185 = scmp.eq.s32.totalorder %s20, 0
      %p186 = por %p184, %p185
      %p187 = scmp.ne.s32.totalorder %s173, %s174
      %p188 = scmp.eq.s32.totalorder %s21, 1
      %p189 = por %p187, %p188
      %p191 = scmp.ne.s32.totalorder %s174, %s190
      %p192 = scmp.eq.s32.totalorder %s21, 0
      %p193 = por %p191, %p192
      %p194 = scmp.le.s32.totalorder 1, %s15
      %p195 = scmp.lt.s32.totalorder %s15, 3
      %p196 = pnand %p194, %p195
      %p197 = pneg %p196
      // Predicated region
      $region9: #{tpu_custom_call.1} parent=5 // pred_check
        _
      $region10: #{tpu_custom_call.1} parent=5 // pred_check_branch
        %199 = sbr.rel (%p196) target = $region12
      $region11: #{tpu_custom_call.1} parent=5 // pred_region
        %s200 = ssub.s32 %s15, 1
        // Predicated region
        $region13: #{tpu_custom_call.1} parent=11 // pred_check
          %p201 = pneg %p76
        $region14: #{tpu_custom_call.1} parent=11 // pred_check_branch
          %203 = sbr.rel (%p201) target = $region16
        $region15: #{tpu_custom_call.1} parent=11 // pred_region
          _
        $region16: #{tpu_custom_call.1} parent=11 // pred_fallthru
          _
        // Predicated region
        $region17: #{tpu_custom_call.1} parent=11 // pred_check
          %p204 = pneg %p97
        $region18: #{tpu_custom_call.1} parent=11 // pred_check_branch
          %206 = sbr.rel (%p204) target = $region20
        $region19: #{tpu_custom_call.1} parent=11 // pred_region
          _
        $region20: #{tpu_custom_call.1} parent=11 // pred_fallthru
          _
        // Predicated region
        $region21: #{tpu_custom_call.1} parent=11 // pred_check
          %p207 = pneg %p118
        $region22: #{tpu_custom_call.1} parent=11 // pred_check_branch
          %209 = sbr.rel (%p207) target = $region24
        $region23: #{tpu_custom_call.1} parent=11 // pred_region
          _
        $region24: #{tpu_custom_call.1} parent=11 // pred_fallthru
          _
        // Predicated region
        $region25: #{tpu_custom_call.1} parent=11 // pred_check
          %p210 = pneg %p139
        $region26: #{tpu_custom_call.1} parent=11 // pred_check_branch
          %212 = sbr.rel (%p210) target = $region28
        $region27: #{tpu_custom_call.1} parent=11 // pred_region
          _
        $region28: #{tpu_custom_call.1} parent=11 // pred_fallthru
          _
        // Predicated region
        $region29: #{tpu_custom_call.1} parent=11 // pred_check
          %p213 = pneg %p160
        $region30: #{tpu_custom_call.1} parent=11 // pred_check_branch
          %215 = sbr.rel (%p213) target = $region32
        $region31: #{tpu_custom_call.1} parent=11 // pred_region
          _
        $region32: #{tpu_custom_call.1} parent=11 // pred_fallthru
          _
      $region12: #{tpu_custom_call.1} parent=5 // pred_fallthru
        _
      %p216 = scmp.lt.s32.totalorder %s15, 2
      // Predicated region
      $region33: #{tpu_custom_call.1} parent=5 // pred_check
        %p217 = pneg %p216
      $region34: #{tpu_custom_call.1} parent=5 // pred_check_branch
        %219 = sbr.rel (%p217) target = $region36
      $region35: #{tpu_custom_call.1} parent=5 // pred_region
        // Predicated region
        $region37: #{tpu_custom_call.1} parent=35 // pred_check
          %p220 = pneg %p49
        $region38: #{tpu_custom_call.1} parent=35 // pred_check_branch
          %222 = sbr.rel (%p220) target = $region40
        $region39: #{tpu_custom_call.1} parent=35 // pred_region
          %s223 = smul.u32 2, %s23
          %p224 = scmp.lt.s32.totalorder %s22, 1
          %s225 = scalar_select %p224, %s22, 1
          %p226 = scmp.lt.s32.totalorder %s223, 1
          %s227 = scalar_select %p226, %s223, 1
          %s228 = smul.addr %s225, 4
          %s229 = sadd.s32 %s227, %s228
          %s230 = smul.addr %s229, 4
          %s231 = scalar_lea.vmem %s0, %s230
          %s232 = smul.u32 2, %s23
        $region40: #{tpu_custom_call.1} parent=35 // pred_fallthru
          _
      $region36: #{tpu_custom_call.1} parent=5 // pred_fallthru
        _
      %p233 = scmp.le.s32.totalorder 1, %s15
      %p234 = scmp.lt.s32.totalorder %s15, 3
      %p235 = pnand %p233, %p234
      %p236 = pneg %p235
      // Predicated region
      $region41: #{tpu_custom_call.1} parent=5 // pred_check
        _
      $region42: #{tpu_custom_call.1} parent=5 // pred_check_branch
        %238 = sbr.rel (%p235) target = $region44
      $region43: #{tpu_custom_call.1} parent=5 // pred_region
        %s239 = ssub.s32 %s15, 1
        %s240 = smul.u32 2, %s25
        %p241 = scmp.lt.s32.totalorder %s24, 1
        %s242 = scalar_select %p241, %s24, 1
        %p243 = scmp.lt.s32.totalorder %s240, 1
        %s244 = scalar_select %p243, %s240, 1
        %s245 = smul.addr %s242, 4
        %s246 = sadd.s32 %s244, %s245
        %s247 = smul.addr %s246, 4
        %s248 = scalar_lea.vmem %s0, %s247
        %p249 = pneg %p55
        %p250 = pneg %p52
        %p251 = pneg %p76
        %p252 = pneg %p73
        %p253 = pneg %p97
        %p254 = pneg %p94
        %p255 = pneg %p118
        %p256 = pneg %p115
        %p257 = pneg %p139
        %p258 = pneg %p136
        %p259 = pneg %p160
        %p260 = pneg %p157
        %p261 = pneg %p186
        %p262 = pneg %p183
        %s263 = sand.u32 %s173, 1
        %s264 = scalar_lea.sflag [#allocation5], %s263
        %s265 = sand.u32 %s173, 1
        %s266 = smul.addr %s265, 8
        %s267 = scalar_lea.vmem [#allocation4], %s266
        %s268 = smul.u32 2, %s25
        %p269 = scmp.lt.s32.totalorder %s24, 1
        %s270 = scalar_select %p269, %s24, 1
        %p271 = scmp.lt.s32.totalorder %s268, 1
        %s272 = scalar_select %p271, %s268, 1
        %s273 = smul.addr %s270, 4
        %s274 = sadd.s32 %s272, %s273
        %s275 = smul.addr %s274, 4
        %s276 = scalar_lea.vmem %s0, %s275
        %s277 = smul.u32 2, %s25
        %p279 = scmp.eq.s32.totalorder %s25, 0
        // Predicated region
        $region45: #{tpu_custom_call.1} parent=43 // pred_check
          %p280 = pneg %p279
        $region46: #{tpu_custom_call.1} parent=43 // pred_check_branch
          %282 = sbr.rel (%p280) target = $region48
        $region47: #{tpu_custom_call.1} parent=43 // pred_region
          %283 = vst [vmem:[#allocation2] sm:$0xff] 0.0
          %vm284 = vcmask 7168
          %285 = vst.msk [vmem:[#allocation3] sm:$0xff] %vm284, 0.0
        $region48: #{tpu_custom_call.1} parent=43 // pred_fallthru
          _
        %v286 = vld [vmem:[%s276] sm:$0xff]
        %v287 = vld [vmem:[%s276 + $0x8] sm:$0xff]
        %v288 = vld [vmem:[%s1] sm:$0xf]
        %v289 = vld [vmem:[%s1 + $0x4] sm:$0xf]
        %v290 = vld [vmem:[%s1 + $0x8] sm:$0xf]
        %v291 = vld [vmem:[%s1 + $0xc] sm:$0xf]
        %v292 = vld [vmem:[%s1 + $0x10] sm:$0xf]
        %v293 = vld [vmem:[%s1 + $0x14] sm:$0xf]
        %v294 = vld [vmem:[%s1 + $0x18] sm:$0xf]
        %v295 = vld [vmem:[%s1 + $0x1c] sm:$0xf]
        %v296 = vld [vmem:[%s1 + $0x20] sm:$0xf]
        %v297 = vld [vmem:[%s1 + $0x24] sm:$0xf]
        %v298 = vld [vmem:[%s1 + $0x28] sm:$0xf]
        %v299 = vld [vmem:[%s1 + $0x2c] sm:$0xf]
        %v300 = vld [vmem:[%s1 + $0x30] sm:$0xf]
        %v301 = vld [vmem:[%s1 + $0x34] sm:$0xf]
        %v302 = vld [vmem:[%s1 + $0x38] sm:$0xf]
        %v303 = vld [vmem:[%s1 + $0x3c] sm:$0xf]
        %v304 = vld [vmem:[%s2] sm:$0xff]
        %v305 = vld [vmem:[%s2 + $0x8] sm:$0xff]
        %v306 = vld [vmem:[%s2 + $0x10] sm:$0xff]
        %v307 = vld [vmem:[%s2 + $0x18] sm:$0xff]
        %v308 = vld [vmem:[%s2 + $0x20] sm:$0xff]
        %v309 = vld [vmem:[%s2 + $0x28] sm:$0xff]
        %v310 = vld [vmem:[%s2 + $0x30] sm:$0xff]
        %v311 = vld [vmem:[%s2 + $0x38] sm:$0xff]
        %v312 = vld [vmem:[%s2 + $0x40] sm:$0xff]
        %v313 = vld [vmem:[%s2 + $0x48] sm:$0xff]
        %v314 = vld [vmem:[%s2 + $0x50] sm:$0xff]
        %v315 = vld [vmem:[%s2 + $0x58] sm:$0xff]
        %v316 = vld [vmem:[%s2 + $0x60] sm:$0xff]
        %v317 = vld [vmem:[%s2 + $0x68] sm:$0xff]
        %v318 = vld [vmem:[%s2 + $0x70] sm:$0xff]
        %v319 = vld [vmem:[%s2 + $0x78] sm:$0xff]
        %321 = vset.pattern.permute.xlu0 0
        %322 = vperm.xlu0 %321, %v304
        %v323 = vpop.permute.xlu0 %322
        %326 = vset.pattern.permute.xlu0 0
        %327 = vperm.xlu0 %326, %v305
        %v328 = vpop.permute.xlu0 %327
        %331 = vset.pattern.permute.xlu0 0
        %332 = vperm.xlu0 %331, %v306
        %v333 = vpop.permute.xlu0 %332
        %336 = vset.pattern.permute.xlu0 0
        %337 = vperm.xlu0 %336, %v307
        %v338 = vpop.permute.xlu0 %337
        %341 = vset.pattern.permute.xlu0 0
        %342 = vperm.xlu0 %341, %v308
        %v343 = vpop.permute.xlu0 %342
        %346 = vset.pattern.permute.xlu0 0
        %347 = vperm.xlu0 %346, %v309
        %v348 = vpop.permute.xlu0 %347
        %351 = vset.pattern.permute.xlu0 0
        %352 = vperm.xlu0 %351, %v310
        %v353 = vpop.permute.xlu0 %352
        %356 = vset.pattern.permute.xlu0 0
        %357 = vperm.xlu0 %356, %v311
        %v358 = vpop.permute.xlu0 %357
        %361 = vset.pattern.permute.xlu0 0
        %362 = vperm.xlu0 %361, %v312
        %v363 = vpop.permute.xlu0 %362
        %366 = vset.pattern.permute.xlu0 0
        %367 = vperm.xlu0 %366, %v313
        %v368 = vpop.permute.xlu0 %367
        %371 = vset.pattern.permute.xlu0 0
        %372 = vperm.xlu0 %371, %v314
        %v373 = vpop.permute.xlu0 %372
        %376 = vset.pattern.permute.xlu0 0
        %377 = vperm.xlu0 %376, %v315
        %v378 = vpop.permute.xlu0 %377
        %381 = vset.pattern.permute.xlu0 0
        %382 = vperm.xlu0 %381, %v316
        %v383 = vpop.permute.xlu0 %382
        %386 = vset.pattern.permute.xlu0 0
        %387 = vperm.xlu0 %386, %v317
        %v388 = vpop.permute.xlu0 %387
        %391 = vset.pattern.permute.xlu0 0
        %392 = vperm.xlu0 %391, %v318
        %v393 = vpop.permute.xlu0 %392
        %396 = vset.pattern.permute.xlu0 0
        %397 = vperm.xlu0 %396, %v319
        %v398 = vpop.permute.xlu0 %397
        %v416 = vunpack.c.l.b16 %v288
        %v417 = vunpack.c.l.b16 %v289
        %v418 = vunpack.c.l.b16 %v290
        %v419 = vunpack.c.l.b16 %v291
        %v420 = vunpack.c.l.b16 %v292
        %v421 = vunpack.c.l.b16 %v293
        %v422 = vunpack.c.l.b16 %v294
        %v423 = vunpack.c.l.b16 %v295
        %v424 = vunpack.c.l.b16 %v296
        %v425 = vunpack.c.l.b16 %v297
        %v426 = vunpack.c.l.b16 %v298
        %v427 = vunpack.c.l.b16 %v299
        %v428 = vunpack.c.l.b16 %v300
        %v429 = vunpack.c.l.b16 %v301
        %v430 = vunpack.c.l.b16 %v302
        %v431 = vunpack.c.l.b16 %v303
        %v432 = vpack.c.b16 %v417, %v416
        %v433 = vpack.c.b16 %v419, %v418
        %v434 = vpack.c.b16 %v421, %v420
        %v435 = vpack.c.b16 %v423, %v422
        %v436 = vpack.c.b16 %v425, %v424
        %v437 = vpack.c.b16 %v427, %v426
        %v438 = vpack.c.b16 %v429, %v428
        %v439 = vpack.c.b16 %v431, %v430
        %v442 = vunpack.c.l.b16 %v286
        %v443 = vunpack.c.h.b16 %v286
        %v444 = vunpack.c.l.b16 %v287
        %v445 = vunpack.c.h.b16 %v287
        %v446 = vpack.c.b16 %v444, %v442
        %v447 = vpack.c.b16 %v445, %v443
        %vm450 = vcmask 130048
        %v452 = vsel %vm450, %v432, 0
        %v455 = vsel %vm450, %v433, 0
        %v458 = vsel %vm450, %v434, 0
        %v461 = vsel %vm450, %v435, 0
        %v464 = vsel %vm450, %v436, 0
        %v467 = vsel %vm450, %v437, 0
        %v470 = vsel %vm450, %v438, 0
        %v473 = vsel %vm450, %v439, 0
        %475 = vmatprep.subr.bf16.mxu0 0
        %476 = vmatpush1.bf16.msra.mxu0 0
        %477 = vmatprep.subr.bf16.mxu0 0
        %478 = vmatpush1.bf16.msra.mxu0 0
        %479 = vmatprep.subr.bf16.mxu0 0
        %480 = vmatpush1.bf16.msra.mxu0 0
        %481 = vmatprep.subr.bf16.mxu0 0
        %482 = vmatpush1.bf16.msra.mxu0 0
        %483 = vmatprep.subr.bf16.mxu0 0
        %484 = vmatpush1.bf16.msra.mxu0 0
        %485 = vmatprep.subr.bf16.mxu0 0
        %486 = vmatpush1.bf16.msra.mxu0 0
        %487 = vmatprep.subr.bf16.mxu0 0
        %488 = vmatpush1.bf16.msra.mxu0 0
        %489 = vmatprep.subr.bf16.mxu0 %v447
        %490 = vmatpush1.bf16.msra.mxu0 %v446
        %491 = vmatprep.subr.bf16.mxu0 0
        %492 = vmatpush2.bf16.msra.mxu0 0
        %493 = vmatprep.subr.bf16.mxu0 0
        %494 = vmatpush2.bf16.msra.mxu0 0
        %495 = vmatprep.subr.bf16.mxu0 0
        %496 = vmatpush2.bf16.msra.mxu0 0
        %497 = vmatprep.subr.bf16.mxu0 0
        %498 = vmatpush2.bf16.msra.mxu0 0
        %499 = vmatprep.subr.bf16.mxu0 0
        %500 = vmatpush2.bf16.msra.mxu0 0
        %501 = vmatprep.subr.bf16.mxu0 0
        %502 = vmatpush2.bf16.msra.mxu0 0
        %503 = vmatprep.subr.bf16.mxu0 0
        %504 = vmatpush2.bf16.msra.mxu0 0
        %505 = vmatprep.subr.bf16.mxu0 0
        %506 = vmatpush2.bf16.msra.mxu0 0
        %507 = vmatprep.mubr.bf16.mxu0 0
        %508 = vmatmul.mubr.bf16.gmra.mxu0 %v452
        %v509 = vpop.f32.mrf.mxu0
        %v510 = vadd.f32 %v323, %v509
        %v511 = vpop.f32.mrf.mxu0
        %v512 = vadd.f32 %v323, %v511
        %v513 = vpop.f32.mrf.mxu0
        %v514 = vadd.f32 %v328, %v513
        %v515 = vpop.f32.mrf.mxu0
        %v516 = vadd.f32 %v328, %v515
        %517 = vmatprep.mubr.bf16.mxu0 0
        %518 = vmatmul.mubr.bf16.gmra.mxu0 %v455
        %v519 = vpop.f32.mrf.mxu0
        %v520 = vadd.f32 %v333, %v519
        %v521 = vpop.f32.mrf.mxu0
        %v522 = vadd.f32 %v333, %v521
        %v523 = vpop.f32.mrf.mxu0
        %v524 = vadd.f32 %v338, %v523
        %v525 = vpop.f32.mrf.mxu0
        %v526 = vadd.f32 %v338, %v525
        %527 = vmatprep.mubr.bf16.mxu0 0
        %528 = vmatmul.mubr.bf16.gmra.mxu0 %v458
        %v529 = vpop.f32.mrf.mxu0
        %v530 = vadd.f32 %v343, %v529
        %v531 = vpop.f32.mrf.mxu0
        %v532 = vadd.f32 %v343, %v531
        %v533 = vpop.f32.mrf.mxu0
        %v534 = vadd.f32 %v348, %v533
        %v535 = vpop.f32.mrf.mxu0
        %v536 = vadd.f32 %v348, %v535
        %537 = vmatprep.mubr.bf16.mxu0 0
        %538 = vmatmul.mubr.bf16.gmra.mxu0 %v461
        %v539 = vpop.f32.mrf.mxu0
        %v540 = vadd.f32 %v353, %v539
        %v541 = vpop.f32.mrf.mxu0
        %v542 = vadd.f32 %v353, %v541
        %v543 = vpop.f32.mrf.mxu0
        %v544 = vadd.f32 %v358, %v543
        %v545 = vpop.f32.mrf.mxu0
        %v546 = vadd.f32 %v358, %v545
        %547 = vmatprep.mubr.bf16.mxu0 0
        %548 = vmatmul.mubr.bf16.gmra.mxu0 %v464
        %v549 = vpop.f32.mrf.mxu0
        %v550 = vadd.f32 %v363, %v549
        %v551 = vpop.f32.mrf.mxu0
        %v552 = vadd.f32 %v363, %v551
        %v553 = vpop.f32.mrf.mxu0
        %v554 = vadd.f32 %v368, %v553
        %v555 = vpop.f32.mrf.mxu0
        %v556 = vadd.f32 %v368, %v555
        %557 = vmatprep.mubr.bf16.mxu0 0
        %558 = vmatmul.mubr.bf16.gmra.mxu0 %v467
        %v559 = vpop.f32.mrf.mxu0
        %v560 = vadd.f32 %v373, %v559
        %v561 = vpop.f32.mrf.mxu0
        %v562 = vadd.f32 %v373, %v561
        %v563 = vpop.f32.mrf.mxu0
        %v564 = vadd.f32 %v378, %v563
        %v565 = vpop.f32.mrf.mxu0
        %v566 = vadd.f32 %v378, %v565
        %567 = vmatprep.mubr.bf16.mxu0 0
        %568 = vmatmul.mubr.bf16.gmra.mxu0 %v470
        %v569 = vpop.f32.mrf.mxu0
        %v570 = vadd.f32 %v383, %v569
        %v571 = vpop.f32.mrf.mxu0
        %v572 = vadd.f32 %v383, %v571
        %v573 = vpop.f32.mrf.mxu0
        %v574 = vadd.f32 %v388, %v573
        %v575 = vpop.f32.mrf.mxu0
        %v576 = vadd.f32 %v388, %v575
        %577 = vmatprep.mubr.bf16.mxu0 0
        %578 = vmatmul.mubr.bf16.gmra.mxu0 %v473
        %v579 = vpop.f32.mrf.mxu0
        %v580 = vadd.f32 %v393, %v579
        %v581 = vpop.f32.mrf.mxu0
        %v582 = vadd.f32 %v393, %v581
        %v583 = vpop.f32.mrf.mxu0
        %v584 = vadd.f32 %v398, %v583
        %v585 = vpop.f32.mrf.mxu0
        %v586 = vadd.f32 %v398, %v585
        %587 = vdwg.mxu0
        %v588 = vmul.f32 %v510, %v510
        %v589 = vmul.f32 %v512, %v512
        %v590 = vmul.f32 %v514, %v514
        %v591 = vmul.f32 %v516, %v516
        %v592 = vmul.f32 %v520, %v520
        %v593 = vmul.f32 %v522, %v522
        %v594 = vmul.f32 %v524, %v524
        %v595 = vmul.f32 %v526, %v526
        %v596 = vmul.f32 %v530, %v530
        %v597 = vmul.f32 %v532, %v532
        %v598 = vmul.f32 %v534, %v534
        %v599 = vmul.f32 %v536, %v536
        %v600 = vmul.f32 %v540, %v540
        %v601 = vmul.f32 %v542, %v542
        %v602 = vmul.f32 %v544, %v544
        %v603 = vmul.f32 %v546, %v546
        %v604 = vmul.f32 %v550, %v550
        %v605 = vmul.f32 %v552, %v552
        %v606 = vmul.f32 %v554, %v554
        %v607 = vmul.f32 %v556, %v556
        %v608 = vmul.f32 %v560, %v560
        %v609 = vmul.f32 %v562, %v562
        %v610 = vmul.f32 %v564, %v564
        %v611 = vmul.f32 %v566, %v566
        %v612 = vmul.f32 %v570, %v570
        %v613 = vmul.f32 %v572, %v572
        %v614 = vmul.f32 %v574, %v574
        %v615 = vmul.f32 %v576, %v576
        %v616 = vmul.f32 %v580, %v580
        %v617 = vmul.f32 %v582, %v582
        %v618 = vmul.f32 %v584, %v584
        %v619 = vmul.f32 %v586, %v586
        %v620 = vadd.f32 %v588, %v590
        %v621 = vadd.f32 %v620, %v592
        %v622 = vadd.f32 %v621, %v594
        %v623 = vadd.f32 %v622, %v596
        %v624 = vadd.f32 %v623, %v598
        %v625 = vadd.f32 %v624, %v600
        %v626 = vadd.f32 %v625, %v602
        %v627 = vadd.f32 %v626, %v604
        %v628 = vadd.f32 %v627, %v606
        %v629 = vadd.f32 %v628, %v608
        %v630 = vadd.f32 %v629, %v610
        %v631 = vadd.f32 %v630, %v612
        %v632 = vadd.f32 %v631, %v614
        %v633 = vadd.f32 %v632, %v616
        %v634 = vadd.f32 %v633, %v618
        %v635 = vrot.slane %v634, 4
        %v636 = vadd.f32 %v634, %v635
        %v637 = vrot.slane %v636, 2
        %v638 = vadd.f32 %v636, %v637
        %v639 = vrot.slane %v638, 1
        %v640 = vadd.f32 %v638, %v639
        %v641 = vadd.f32 %v589, %v591
        %v642 = vadd.f32 %v641, %v593
        %v643 = vadd.f32 %v642, %v595
        %v644 = vadd.f32 %v643, %v597
        %v645 = vadd.f32 %v644, %v599
        %v646 = vadd.f32 %v645, %v601
        %v647 = vadd.f32 %v646, %v603
        %v648 = vadd.f32 %v647, %v605
        %v649 = vadd.f32 %v648, %v607
        %v650 = vadd.f32 %v649, %v609
        %v651 = vadd.f32 %v650, %v611
        %v652 = vadd.f32 %v651, %v613
        %v653 = vadd.f32 %v652, %v615
        %v654 = vadd.f32 %v653, %v617
        %v655 = vadd.f32 %v654, %v619
        %v656 = vrot.slane %v655, 4
        %v657 = vadd.f32 %v655, %v656
        %v658 = vrot.slane %v657, 2
        %v659 = vadd.f32 %v657, %v658
        %v660 = vrot.slane %v659, 1
        %v661 = vadd.f32 %v659, %v660
        %v662 = vmax.f32 %v640, 1e-24
        %v663 = vmax.f32 %v661, 1e-24
        %v664 = vrsqrt.pop %v662
        %v665 = vrsqrt.pop %v663
        %v666 = vmul.f32 %v510, %v664
        %v667 = vmul.f32 %v512, %v665
        %v668 = vmul.f32 %v514, %v664
        %v669 = vmul.f32 %v516, %v665
        %v670 = vmul.f32 %v520, %v664
        %v671 = vmul.f32 %v522, %v665
        %v672 = vmul.f32 %v524, %v664
        %v673 = vmul.f32 %v526, %v665
        %v674 = vmul.f32 %v530, %v664
        %v675 = vmul.f32 %v532, %v665
        %v676 = vmul.f32 %v534, %v664
        %v677 = vmul.f32 %v536, %v665
        %v678 = vmul.f32 %v540, %v664
        %v679 = vmul.f32 %v542, %v665
        %v680 = vmul.f32 %v544, %v664
        %v681 = vmul.f32 %v546, %v665
        %v682 = vmul.f32 %v550, %v664
        %v683 = vmul.f32 %v552, %v665
        %v684 = vmul.f32 %v554, %v664
        %v685 = vmul.f32 %v556, %v665
        %v686 = vmul.f32 %v560, %v664
        %v687 = vmul.f32 %v562, %v665
        %v688 = vmul.f32 %v564, %v664
        %v689 = vmul.f32 %v566, %v665
        %v690 = vmul.f32 %v570, %v664
        %v691 = vmul.f32 %v572, %v665
        %v692 = vmul.f32 %v574, %v664
        %v693 = vmul.f32 %v576, %v665
        %v694 = vmul.f32 %v580, %v664
        %v695 = vmul.f32 %v582, %v665
        %v696 = vmul.f32 %v584, %v664
        %v697 = vmul.f32 %v586, %v665
        %v698 = vpack.c.bf16 %v668, %v666
        %v699 = vpack.c.bf16 %v669, %v667
        %v700 = vpack.c.bf16 %v672, %v670
        %v701 = vpack.c.bf16 %v673, %v671
        %v702 = vpack.c.bf16 %v676, %v674
        %v703 = vpack.c.bf16 %v677, %v675
        %v704 = vpack.c.bf16 %v680, %v678
        %v705 = vpack.c.bf16 %v681, %v679
        %v706 = vpack.c.bf16 %v684, %v682
        %v707 = vpack.c.bf16 %v685, %v683
        %v708 = vpack.c.bf16 %v688, %v686
        %v709 = vpack.c.bf16 %v689, %v687
        %v710 = vpack.c.bf16 %v692, %v690
        %v711 = vpack.c.bf16 %v693, %v691
        %v712 = vpack.c.bf16 %v696, %v694
        %v713 = vpack.c.bf16 %v697, %v695
        %v714 = vld [vmem:[%s3] sm:$0xf]
        %v715 = vld [vmem:[%s4] sm:$0xff]
        %717 = vset.pattern.permute.xlu0 0
        %718 = vperm.xlu0 %717, %v715
        %v719 = vpop.permute.xlu0 %718
        %721 = vmatprep.subr.bf16.mxu0 %v713
        %722 = vmatpush1.bf16.msra.mxu0 %v712
        %723 = vmatprep.subr.bf16.mxu0 %v711
        %724 = vmatpush1.bf16.msra.mxu0 %v710
        %725 = vmatprep.subr.bf16.mxu0 %v709
        %726 = vmatpush1.bf16.msra.mxu0 %v708
        %727 = vmatprep.subr.bf16.mxu0 %v707
        %728 = vmatpush1.bf16.msra.mxu0 %v706
        %729 = vmatprep.subr.bf16.mxu0 %v705
        %730 = vmatpush1.bf16.msra.mxu0 %v704
        %731 = vmatprep.subr.bf16.mxu0 %v703
        %732 = vmatpush1.bf16.msra.mxu0 %v702
        %733 = vmatprep.subr.bf16.mxu0 %v701
        %734 = vmatpush1.bf16.msra.mxu0 %v700
        %735 = vmatprep.subr.bf16.mxu0 %v699
        %736 = vmatpush1.bf16.msra.mxu0 %v698
        %737 = vmatprep.subr.bf16.mxu0 0
        %738 = vmatpush2.bf16.msra.mxu0 0
        %739 = vmatprep.subr.bf16.mxu0 0
        %740 = vmatpush2.bf16.msra.mxu0 0
        %741 = vmatprep.subr.bf16.mxu0 0
        %742 = vmatpush2.bf16.msra.mxu0 0
        %743 = vmatprep.subr.bf16.mxu0 0
        %744 = vmatpush2.bf16.msra.mxu0 0
        %745 = vmatprep.subr.bf16.mxu0 0
        %746 = vmatpush2.bf16.msra.mxu0 0
        %747 = vmatprep.subr.bf16.mxu0 0
        %748 = vmatpush2.bf16.msra.mxu0 0
        %749 = vmatprep.subr.bf16.mxu0 0
        %750 = vmatpush2.bf16.msra.mxu0 0
        %751 = vmatprep.subr.bf16.mxu0 0
        %752 = vmatpush2.bf16.msra.mxu0 0
        %753 = vmatprep.mubr.bf16.mxu0 0
        %754 = vmatmul.mubr.bf16.gmra.mxu0 %v714
        %v755 = vpop.f32.mrf.mxu0
        %v756 = vadd.f32 %v719, %v755
        %v757 = vpop.f32.mrf.mxu0
        %v758 = vadd.f32 %v719, %v757
        %v759 = vpop.f32.mrf.mxu0
        %v760 = vpop.f32.mrf.mxu0
        %761 = vdwg.mxu0
        %v762 = vrot.slane %v756, 4
        %v763 = vmax.f32 %v756, %v762
        %v764 = vrot.slane %v763, 2
        %v765 = vmax.f32 %v763, %v764
        %v766 = vrot.slane %v765, 1
        %v767 = vmax.f32 %v765, %v766
        %v768 = vrot.slane %v758, 4
        %v769 = vmax.f32 %v758, %v768
        %v770 = vrot.slane %v769, 2
        %v771 = vmax.f32 %v769, %v770
        %v772 = vrot.slane %v771, 1
        %v773 = vmax.f32 %v771, %v772
        %v774 = vsub.f32 %v756, %v767
        %v775 = vsub.f32 %v758, %v773
        %v776 = vmul.f32 %v774, 1.442695
        %v777 = vpow.pop %v776
        %v778 = vmul.f32 %v775, 1.442695
        %v779 = vpow.pop %v778
        %v780 = vrot.slane %v777, 4
        %v781 = vadd.f32 %v777, %v780
        %v782 = vrot.slane %v781, 2
        %v783 = vadd.f32 %v781, %v782
        %v784 = vrot.slane %v783, 1
        %v785 = vadd.f32 %v783, %v784
        %v786 = vrot.slane %v779, 4
        %v787 = vadd.f32 %v779, %v786
        %v788 = vrot.slane %v787, 2
        %v789 = vadd.f32 %v787, %v788
        %v790 = vrot.slane %v789, 1
        %v791 = vadd.f32 %v789, %v790
        %v792 = vrcp.pop %v785
        %v793 = vrcp.pop %v791
        %v794 = vmul.f32 %v777, %v792
        %v795 = vmul.f32 %v779, %v793
        %v796 = vld [vmem:[#allocation2] sm:$0xff]
        %v797 = vpack.c.bf16 %v794, %v794
        %v798 = vpack.c.bf16 %v795, %v795
        %799 = vmatprep.subr.bf16.mxu0 %v713
        %800 = vmatpush1.bf16.xpose.msra.mxu0 %v712
        %801 = vmatprep.subr.bf16.mxu0 %v711
        %802 = vmatpush1.bf16.xpose.msra.mxu0 %v710
        %803 = vmatprep.subr.bf16.mxu0 %v709
        %804 = vmatpush1.bf16.xpose.msra.mxu0 %v708
        %805 = vmatprep.subr.bf16.mxu0 %v707
        %806 = vmatpush1.bf16.xpose.msra.mxu0 %v706
        %807 = vmatprep.subr.bf16.mxu0 %v705
        %808 = vmatpush1.bf16.xpose.msra.mxu0 %v704
        %809 = vmatprep.subr.bf16.mxu0 %v703
        %810 = vmatpush1.bf16.xpose.msra.mxu0 %v702
        %811 = vmatprep.subr.bf16.mxu0 %v701
        %812 = vmatpush1.bf16.xpose.msra.mxu0 %v700
        %813 = vmatprep.subr.bf16.mxu0 %v699
        %814 = vmatpush1.bf16.xpose.msra.mxu0 %v698
        %815 = vmatprep.subr.bf16.mxu0 0
        %816 = vmatpush2.bf16.xpose.msra.mxu0 0
        %817 = vmatprep.subr.bf16.mxu0 0
        %818 = vmatpush2.bf16.xpose.msra.mxu0 0
        %819 = vmatprep.subr.bf16.mxu0 0
        %820 = vmatpush2.bf16.xpose.msra.mxu0 0
        %821 = vmatprep.subr.bf16.mxu0 0
        %822 = vmatpush2.bf16.xpose.msra.mxu0 0
        %823 = vmatprep.subr.bf16.mxu0 0
        %824 = vmatpush2.bf16.xpose.msra.mxu0 0
        %825 = vmatprep.subr.bf16.mxu0 0
        %826 = vmatpush2.bf16.xpose.msra.mxu0 0
        %827 = vmatprep.subr.bf16.mxu0 0
        %828 = vmatpush2.bf16.xpose.msra.mxu0 0
        %829 = vmatprep.subr.bf16.mxu0 0
        %830 = vmatpush2.bf16.xpose.msra.mxu0 0
        %831 = vmatprep.mubr.bf16.mxu0 %v798
        %832 = vmatmul.mubr.bf16.gmra.mxu0 %v797
        %v833 = vpop.f32.mrf.mxu0
        %v834 = vadd.f32 0.0, %v833
        %v835 = vpop.f32.mrf.mxu0
        %v836 = vpop.f32.mrf.mxu0
        %v837 = vpop.f32.mrf.mxu0
        %838 = vdwg.mxu0
        %v839 = vadd.f32 %v796, %v834
        %840 = vst [vmem:[#allocation2] sm:$0xff] %v839
        %v841 = vld [vmem:[#allocation3] sm:$0xff]
        %v842 = vadd.f32 %v794, %v795
        %843 = vadd.xlane.f32.xlu0 %v842
        %v844 = vpop.xlane.xlu0 %843
        %v845 = vadd.f32 %v841, %v844
        %vm846 = vcmask 7168
        %847 = vst.msk [vmem:[#allocation3] sm:$0xff] %vm846, %v845
        // Predicated region
        $region49: #{tpu_custom_call.1} parent=43 // pred_check
          %p848 = pneg %p279
        $region50: #{tpu_custom_call.1} parent=43 // pred_check_branch
          %850 = sbr.rel (%p848) target = $region52
        $region51: #{tpu_custom_call.1} parent=43 // pred_region
          %v851 = vld [vmem:[#allocation2] sm:$0xff]
          %v852 = vld [vmem:[%s5] sm:$0xff]
          %v853 = vld [vmem:[#allocation3] sm:$0xff]
          %855 = vset.pattern.permute.xlu0 0
          %856 = vperm.xlu0 %855, %v853
          %v857 = vpop.permute.xlu0 %856
          %v859 = vmul.f32 %v852, %v857
          %v860 = vsub.f32 %v851, %v859
          %v861 = vmul.f32 %v860, %v860
          %862 = vadd.xlane.f32.xlu0 %v861
          %v863 = vpop.xlane.xlu0 %862
          %v864 = vmax.f32 %v863, 1e-24
          %v865 = vrsqrt.pop %v864
          %v866 = vmul.f32 %v860, %v865
          %v867 = vmul.f32 %v866, %v866
          %868 = vadd.xlane.f32.xlu0 %v867
          %v869 = vpop.xlane.xlu0 %868
          %v870 = vrot.slane %v869, 4
          %v871 = vadd.f32 %v869, %v870
          %v872 = vrot.slane %v871, 2
          %v873 = vadd.f32 %v871, %v872
          %v874 = vrot.slane %v873, 1
          %v875 = vadd.f32 %v873, %v874
          %s876 = vtos %v875
          %s877 = smax.f32 %s876, 1e-24
          %v878 = vstv %s877
          %v879 = vrsqrt.pop %v878
          %s880 = vtos %v879
          %v881 = vstv %s880
          %v882 = vmul.f32 %v866, %v881
          %883 = vst [vmem:[%s267] sm:$0xff] %v882
        $region52: #{tpu_custom_call.1} parent=43 // pred_fallthru
          _
        %s884 = sand.u32 %s173, 1
        %s885 = scalar_lea.sflag [#allocation5], %s884
        %s886 = sand.u32 %s173, 1
        %s887 = smul.addr %s886, 8
        %s888 = scalar_lea.vmem [#allocation4], %s887
        // Predicated region
        $region53: #{tpu_custom_call.1} parent=43 // pred_check
          %p889 = pneg %p183
        $region54: #{tpu_custom_call.1} parent=43 // pred_check_branch
          %891 = sbr.rel (%p889) target = $region56
        $region55: #{tpu_custom_call.1} parent=43 // pred_region
          %s893 = ssub.s32 128, 128
          %894 = vsyncadd %s885, %s893
          %s895 = smul.addr %s24, 128
          %s896 = scalar_lea.hbm %s6, %s895
          %s898 = sshll.u32 %s888, 4
          %s899 = int_to_ptr.vmem [resolvable:$true] %s898
          %901 = dma.vmem_to_hbm [thread:$0]  %s899, 128, %s896, %s885
        $region56: #{tpu_custom_call.1} parent=43 // pred_fallthru
          _
      $region44: #{tpu_custom_call.1} parent=5 // pred_fallthru
        _
      %p902 = scmp.le.s32.totalorder 2, %s15
      // Predicated region
      $region57: #{tpu_custom_call.1} parent=5 // pred_check
        %p903 = pneg %p902
      $region58: #{tpu_custom_call.1} parent=5 // pred_check_branch
        %905 = sbr.rel (%p903) target = $region60
      $region59: #{tpu_custom_call.1} parent=5 // pred_region
        %s906 = ssub.s32 %s15, 2
        // Predicated region
        $region61: #{tpu_custom_call.1} parent=59 // pred_check
          %p907 = pneg %p189
        $region62: #{tpu_custom_call.1} parent=59 // pred_check_branch
          %909 = sbr.rel (%p907) target = $region64
        $region63: #{tpu_custom_call.1} parent=59 // pred_region
          %s910 = sand.u32 %s174, 1
          %s911 = scalar_lea.sflag [#allocation5], %s910
          %s912 = sand.u32 %s174, 1
          %s913 = smul.addr %s912, 8
          %s914 = scalar_lea.vmem [#allocation4], %s913
          %915 = dma.done %s911, 128
        $region64: #{tpu_custom_call.1} parent=59 // pred_fallthru
          _
      $region60: #{tpu_custom_call.1} parent=5 // pred_fallthru
        _
    $region6: #{tpu_custom_call.1} parent=1 // loop_footer
      %s19 = sadd.s32 1, %s15
    $region7: #{tpu_custom_call.1} parent=1 // loop_footer_branch
      %14 = sbr.rel target = $region3
    $region8: #{tpu_custom_call.1} parent=1 // loop_exit
      _
    %916 = vsyncpa [#allocation5], 1
    %s917 = scalar_lea.sflag [#allocation5], 1
    %918 = vsyncpa %s917, 1

// kernel: tpu_custom_call.1
$region0: #{tpu_custom_call.1}
  #allocation0 [shape = 'u32[]', space=smem, size = 0x4, offset = 0x4, fixed_abs, tag = 'smem constant byte address 0x4 - core index']
  #allocation1 [shape = 'u32[144,128]{1,0:T(1,128)}', space=vmem, size = 0x12000, scoped, tag = 'internal scratch']
  #allocation2 [shape = 'f32[8,128]{1,0:T(8,128)}', space=vmem, size = 0x1000, scoped, tag = 'scratch operand']
  #allocation3 [shape = 'f32[8,1]{1,0:T(8,128)}', space=vmem, size = 0x1000, scoped, tag = 'scratch operand']
  %s0 = inlined_call_operand.vmem [shape: bf16[2,16,256], index: 0, kind: input, shape index: {}]
  %s1 = inlined_call_operand.vmem [shape: bf16[128,16], index: 1, kind: input, shape index: {}]
  %s2 = inlined_call_operand.vmem [shape: f32[128,1], index: 2, kind: input, shape index: {}]
  %s3 = inlined_call_operand.vmem [shape: bf16[8,128], index: 3, kind: input, shape index: {}]
  %s4 = inlined_call_operand.vmem [shape: f32[8,1], index: 4, kind: input, shape index: {}]
  %s5 = inlined_call_operand.vmem [shape: f32[8,128], index: 5, kind: input, shape index: {}]
  %s6 = inlined_call_operand.hbm [shape: f32[2,8,128], index: 6, kind: output, shape index: {}]
  %s7 = sld [smem:[#allocation0]]
  $region65: #{tpu_custom_call.1} parent=0
    _
  %s9 = ssub.s32 1, %s7
  %s10 = scalar_select 0, %s9, %s7
  $region1: #{tpu_custom_call.1} parent=0
    #allocation4 [shape = 'u8[8192]{0}', space=vmem, size = 0x2000, scoped, tag = 'output window, operand 0']
    #allocation5 [shape = 's32[2]{0}', space=sflag, size = 0x8, scoped, tag = 'scoped memory for tpu_custom_call.1']
    %11 = vsyncpa [#allocation5], 0
    %s12 = scalar_lea.sflag [#allocation5], 1
    %13 = vsyncpa %s12, 0
    loop: start=0, step=1, limit=4
    $region2: #{tpu_custom_call.1} parent=1 // loop_pre_header
      _
    $region3: #{tpu_custom_call.1} parent=1 // loop_header
      %s15 = sphi 0, %s19
      %p16 = scmp.ge.s32.totalorder %s15, 4
      %s22 = sphi 0, %s34
      %s23 = sphi 0, %s30
      %s24 = sphi 0, %s22
      %s25 = sphi 0, %s23
      %s26 = sphi 0, %s24
      %s27 = sphi 0, %s25
      %s39 = sphi 0, %s41
      %s42 = sphi 0, %s39
      %s43 = sphi 0, %s42
      %s59 = sphi 0, %s43
      %s63 = sphi 0, %s63
      %s65 = sphi 0, %s63
      %s66 = sphi 0, %s65
      %s80 = sphi 0, %s66
      %s84 = sphi 0, %s84
      %s86 = sphi 0, %s84
      %s87 = sphi 0, %s86
      %s101 = sphi 0, %s87
      %s105 = sphi 0, %s105
      %s107 = sphi 0, %s105
      %s108 = sphi 0, %s107
      %s122 = sphi 0, %s108
      %s126 = sphi 0, %s126
      %s128 = sphi 0, %s126
      %s129 = sphi 0, %s128
      %s143 = sphi 0, %s129
      %s147 = sphi 0, %s147
      %s149 = sphi 0, %s147
      %s150 = sphi 0, %s149
      %s164 = sphi 0, %s150
      %s170 = sphi 0, %s172
      %s173 = sphi 0, %s170
      %s174 = sphi 0, %s173
      %s190 = sphi 0, %s174
    $region4: #{tpu_custom_call.1} parent=1 // loop_header_branch
      %18 = sbr.rel (%p16) target = $region8
    $region5: #{tpu_custom_call.1} parent=1 // loop_body
      %s20 = ssub.s32 %s15, 1
      %s21 = ssub.s32 %s15, 2
      %s28 = sadd.s32 1, %s23
      %p29 = scmp.ge.s32.totalorder %s28, 1
      %s30 = scalar_select %p29, 0, %s28
      %s31 = sadd.s32 1, %s22
      %s32 = scalar_select %p29, %s31, %s22
      %p33 = scmp.ge.s32.totalorder %s32, 2
      %s34 = scalar_select %p33, 0, %s32
      %s35 = ssub.s32 %s22, %s34
      %s36 = ssub.s32 %s23, %s30
      %s37 = sor.u32 %s35, %s36
      %p38 = scmp.eq.s32.totalorder %s37, 0
      %s40 = sadd.s32 %s39, 1
      %s41 = scalar_select %p38, %s39, %s40
      %p44 = pneg %p38
      %p45 = scmp.eq.s32.totalorder %s15, 1
      %p46 = por %p44, %p45
      %p47 = scmp.ne.s32.totalorder %s39, %s42
      %p48 = scmp.eq.s32.totalorder %s15, 0
      %p49 = por %p47, %p48
      %p50 = scmp.ne.s32.totalorder %s39, %s42
      %p51 = scmp.eq.s32.totalorder %s20, 1
      %p52 = por %p50, %p51
      %p53 = scmp.ne.s32.totalorder %s42, %s43
      %p54 = scmp.eq.s32.totalorder %s20, 0
      %p55 = por %p53, %p54
      %p56 = scmp.ne.s32.totalorder %s42, %s43
      %p57 = scmp.eq.s32.totalorder %s21, 1
      %p58 = por %p56, %p57
      %p60 = scmp.ne.s32.totalorder %s43, %s59
      %p61 = scmp.eq.s32.totalorder %s21, 0
      %p62 = por %p60, %p61
      %s64 = sadd.s32 %s63, 1
      %p67 = scmp.eq.s32.totalorder %s15, 1
      %p68 = scmp.ne.s32.totalorder %s63, %s65
      %p69 = scmp.eq.s32.totalorder %s15, 0
      %p70 = por %p68, %p69
      %p71 = scmp.ne.s32.totalorder %s63, %s65
      %p72 = scmp.eq.s32.totalorder %s20, 1
      %p73 = por %p71, %p72
      %p74 = scmp.ne.s32.totalorder %s65, %s66
      %p75 = scmp.eq.s32.totalorder %s20, 0
      %p76 = por %p74, %p75
      %p77 = scmp.ne.s32.totalorder %s65, %s66
      %p78 = scmp.eq.s32.totalorder %s21, 1
      %p79 = por %p77, %p78
      %p81 = scmp.ne.s32.totalorder %s66, %s80
      %p82 = scmp.eq.s32.totalorder %s21, 0
      %p83 = por %p81, %p82
      %s85 = sadd.s32 %s84, 1
      %p88 = scmp.eq.s32.totalorder %s15, 1
      %p89 = scmp.ne.s32.totalorder %s84, %s86
      %p90 = scmp.eq.s32.totalorder %s15, 0
      %p91 = por %p89, %p90
      %p92 = scmp.ne.s32.totalorder %s84, %s86
      %p93 = scmp.eq.s32.totalorder %s20, 1
      %p94 = por %p92, %p93
      %p95 = scmp.ne.s32.totalorder %s86, %s87
      %p96 = scmp.eq.s32.totalorder %s20, 0
      %p97 = por %p95, %p96
      %p98 = scmp.ne.s32.totalorder %s86, %s87
      %p99 = scmp.eq.s32.totalorder %s21, 1
      %p100 = por %p98, %p99
      %p102 = scmp.ne.s32.totalorder %s87, %s101
      %p103 = scmp.eq.s32.totalorder %s21, 0
      %p104 = por %p102, %p103
      %s106 = sadd.s32 %s105, 1
      %p109 = scmp.eq.s32.totalorder %s15, 1
      %p110 = scmp.ne.s32.totalorder %s105, %s107
      %p111 = scmp.eq.s32.totalorder %s15, 0
      %p112 = por %p110, %p111
      %p113 = scmp.ne.s32.totalorder %s105, %s107
      %p114 = scmp.eq.s32.totalorder %s20, 1
      %p115 = por %p113, %p114
      %p116 = scmp.ne.s32.totalorder %s107, %s108
      %p117 = scmp.eq.s32.totalorder %s20, 0
      %p118 = por %p116, %p117
      %p119 = scmp.ne.s32.totalorder %s107, %s108
      %p120 = scmp.eq.s32.totalorder %s21, 1
      %p121 = por %p119, %p120
      %p123 = scmp.ne.s32.totalorder %s108, %s122
      %p124 = scmp.eq.s32.totalorder %s21, 0
      %p125 = por %p123, %p124
      %s127 = sadd.s32 %s126, 1
      %p130 = scmp.eq.s32.totalorder %s15, 1
      %p131 = scmp.ne.s32.totalorder %s126, %s128
      %p132 = scmp.eq.s32.totalorder %s15, 0
      %p133 = por %p131, %p132
      %p134 = scmp.ne.s32.totalorder %s126, %s128
      %p135 = scmp.eq.s32.totalorder %s20, 1
      %p136 = por %p134, %p135
      %p137 = scmp.ne.s32.totalorder %s128, %s129
      %p138 = scmp.eq.s32.totalorder %s20, 0
      %p139 = por %p137, %p138
      %p140 = scmp.ne.s32.totalorder %s128, %s129
      %p141 = scmp.eq.s32.totalorder %s21, 1
      %p142 = por %p140, %p141
      %p144 = scmp.ne.s32.totalorder %s129, %s143
      %p145 = scmp.eq.s32.totalorder %s21, 0
      %p146 = por %p144, %p145
      %s148 = sadd.s32 %s147, 1
      %p151 = scmp.eq.s32.totalorder %s15, 1
      %p152 = scmp.ne.s32.totalorder %s147, %s149
      %p153 = scmp.eq.s32.totalorder %s15, 0
      %p154 = por %p152, %p153
      %p155 = scmp.ne.s32.totalorder %s147, %s149
      %p156 = scmp.eq.s32.totalorder %s20, 1
      %p157 = por %p155, %p156
      %p158 = scmp.ne.s32.totalorder %s149, %s150
      %p159 = scmp.eq.s32.totalorder %s20, 0
      %p160 = por %p158, %p159
      %p161 = scmp.ne.s32.totalorder %s149, %s150
      %p162 = scmp.eq.s32.totalorder %s21, 1
      %p163 = por %p161, %p162
      %p165 = scmp.ne.s32.totalorder %s150, %s164
      %p166 = scmp.eq.s32.totalorder %s21, 0
      %p167 = por %p165, %p166
      %s168 = ssub.s32 %s22, %s34
      %p169 = scmp.eq.s32.totalorder %s168, 0
      %s171 = sadd.s32 %s170, 1
      %s172 = scalar_select %p169, %s170, %s171
      %p175 = pneg %p169
      %p176 = scmp.eq.s32.totalorder %s15, 1
      %p177 = por %p175, %p176
      %p178 = scmp.ne.s32.totalorder %s170, %s173
      %p179 = scmp.eq.s32.totalorder %s15, 0
      %p180 = por %p178, %p179
      %p181 = scmp.ne.s32.totalorder %s170, %s173
      %p182 = scmp.eq.s32.totalorder %s20, 1
      %p183 = por %p181, %p182
      %p184 = scmp.ne.s32.totalorder %s173, %s174
      %p185 = scmp.eq.s32.totalorder %s20, 0
      %p186 = por %p184, %p185
      %p187 = scmp.ne.s32.totalorder %s173, %s174
      %p188 = scmp.eq.s32.totalorder %s21, 1
      %p189 = por %p187, %p188
      %p191 = scmp.ne.s32.totalorder %s174, %s190
      %p192 = scmp.eq.s32.totalorder %s21, 0
      %p193 = por %p191, %p192
      %p194 = scmp.le.s32.totalorder 1, %s15
      %p195 = scmp.lt.s32.totalorder %s15, 3
      %p196 = pnand %p194, %p195
      %p197 = pneg %p196
      // Predicated region
      $region9: #{tpu_custom_call.1} parent=5 // pred_check
        _
      $region10: #{tpu_custom_call.1} parent=5 // pred_check_branch
        %199 = sbr.rel (%p196) target = $region12
      $region11: #{tpu_custom_call.1} parent=5 // pred_region
        %s200 = ssub.s32 %s15, 1
        // Predicated region
        $region13: #{tpu_custom_call.1} parent=11 // pred_check
          %p201 = pneg %p76
        $region14: #{tpu_custom_call.1} parent=11 // pred_check_branch
          %203 = sbr.rel (%p201) target = $region16
        $region15: #{tpu_custom_call.1} parent=11 // pred_region
          _
        $region16: #{tpu_custom_call.1} parent=11 // pred_fallthru
          _
        // Predicated region
        $region17: #{tpu_custom_call.1} parent=11 // pred_check
          %p204 = pneg %p97
        $region18: #{tpu_custom_call.1} parent=11 // pred_check_branch
          %206 = sbr.rel (%p204) target = $region20
        $region19: #{tpu_custom_call.1} parent=11 // pred_region
          _
        $region20: #{tpu_custom_call.1} parent=11 // pred_fallthru
          _
        // Predicated region
        $region21: #{tpu_custom_call.1} parent=11 // pred_check
          %p207 = pneg %p118
        $region22: #{tpu_custom_call.1} parent=11 // pred_check_branch
          %209 = sbr.rel (%p207) target = $region24
        $region23: #{tpu_custom_call.1} parent=11 // pred_region
          _
        $region24: #{tpu_custom_call.1} parent=11 // pred_fallthru
          _
        // Predicated region
        $region25: #{tpu_custom_call.1} parent=11 // pred_check
          %p210 = pneg %p139
        $region26: #{tpu_custom_call.1} parent=11 // pred_check_branch
          %212 = sbr.rel (%p210) target = $region28
        $region27: #{tpu_custom_call.1} parent=11 // pred_region
          _
        $region28: #{tpu_custom_call.1} parent=11 // pred_fallthru
          _
        // Predicated region
        $region29: #{tpu_custom_call.1} parent=11 // pred_check
          %p213 = pneg %p160
        $region30: #{tpu_custom_call.1} parent=11 // pred_check_branch
          %215 = sbr.rel (%p213) target = $region32
        $region31: #{tpu_custom_call.1} parent=11 // pred_region
          _
        $region32: #{tpu_custom_call.1} parent=11 // pred_fallthru
          _
      $region12: #{tpu_custom_call.1} parent=5 // pred_fallthru
        _
      %p216 = scmp.lt.s32.totalorder %s15, 2
      // Predicated region
      $region33: #{tpu_custom_call.1} parent=5 // pred_check
        %p217 = pneg %p216
      $region34: #{tpu_custom_call.1} parent=5 // pred_check_branch
        %219 = sbr.rel (%p217) target = $region36
      $region35: #{tpu_custom_call.1} parent=5 // pred_region
        // Predicated region
        $region37: #{tpu_custom_call.1} parent=35 // pred_check
          %p220 = pneg %p49
        $region38: #{tpu_custom_call.1} parent=35 // pred_check_branch
          %222 = sbr.rel (%p220) target = $region40
        $region39: #{tpu_custom_call.1} parent=35 // pred_region
          %s223 = smul.u32 2, %s23
          %p224 = scmp.lt.s32.totalorder %s22, 1
          %s225 = scalar_select %p224, %s22, 1
          %p226 = scmp.lt.s32.totalorder %s223, 1
          %s227 = scalar_select %p226, %s223, 1
          %s228 = smul.addr %s225, 4
          %s229 = sadd.s32 %s227, %s228
          %s230 = smul.addr %s229, 4
          %s231 = scalar_lea.vmem %s0, %s230
          %s232 = smul.u32 2, %s23
        $region40: #{tpu_custom_call.1} parent=35 // pred_fallthru
          _
      $region36: #{tpu_custom_call.1} parent=5 // pred_fallthru
        _
      %p233 = scmp.le.s32.totalorder 1, %s15
      %p234 = scmp.lt.s32.totalorder %s15, 3
      %p235 = pnand %p233, %p234
      %p236 = pneg %p235
      // Predicated region
      $region41: #{tpu_custom_call.1} parent=5 // pred_check
        _
      $region42: #{tpu_custom_call.1} parent=5 // pred_check_branch
        %238 = sbr.rel (%p235) target = $region44
      $region43: #{tpu_custom_call.1} parent=5 // pred_region
        %s239 = ssub.s32 %s15, 1
        %s240 = smul.u32 2, %s25
        %p241 = scmp.lt.s32.totalorder %s24, 1
        %s242 = scalar_select %p241, %s24, 1
        %p243 = scmp.lt.s32.totalorder %s240, 1
        %s244 = scalar_select %p243, %s240, 1
        %s245 = smul.addr %s242, 4
        %s246 = sadd.s32 %s244, %s245
        %s247 = smul.addr %s246, 4
        %s248 = scalar_lea.vmem %s0, %s247
        %p249 = pneg %p55
        %p250 = pneg %p52
        %p251 = pneg %p76
        %p252 = pneg %p73
        %p253 = pneg %p97
        %p254 = pneg %p94
        %p255 = pneg %p118
        %p256 = pneg %p115
        %p257 = pneg %p139
        %p258 = pneg %p136
        %p259 = pneg %p160
        %p260 = pneg %p157
        %p261 = pneg %p186
        %p262 = pneg %p183
        %s263 = sand.u32 %s173, 1
        %s264 = scalar_lea.sflag [#allocation5], %s263
        %s265 = sand.u32 %s173, 1
        %s266 = smul.addr %s265, 8
        %s267 = scalar_lea.vmem [#allocation4], %s266
        %s268 = smul.u32 2, %s25
        %p269 = scmp.lt.s32.totalorder %s24, 1
        %s270 = scalar_select %p269, %s24, 1
        %p271 = scmp.lt.s32.totalorder %s268, 1
        %s272 = scalar_select %p271, %s268, 1
        %s273 = smul.addr %s270, 4
        %s274 = sadd.s32 %s272, %s273
        %s275 = smul.addr %s274, 4
        %s276 = scalar_lea.vmem %s0, %s275
        %s277 = smul.u32 2, %s25
        %p279 = scmp.eq.s32.totalorder %s25, 0
        // Predicated region
        $region45: #{tpu_custom_call.1} parent=43 // pred_check
          %p280 = pneg %p279
        $region46: #{tpu_custom_call.1} parent=43 // pred_check_branch
          %282 = sbr.rel (%p280) target = $region48
        $region47: #{tpu_custom_call.1} parent=43 // pred_region
          %283 = vst [vmem:[#allocation2] sm:$0xff] 0.0
          %vm284 = vcmask 7168
          %285 = vst.msk [vmem:[#allocation3] sm:$0xff] %vm284, 0.0
        $region48: #{tpu_custom_call.1} parent=43 // pred_fallthru
          _
        %v286 = vld [vmem:[%s276] sm:$0xff]
        %v287 = vld [vmem:[%s276 + $0x8] sm:$0xff]
        %v288 = vld [vmem:[%s1] sm:$0xf]
        %v289 = vld [vmem:[%s1 + $0x4] sm:$0xf]
        %v290 = vld [vmem:[%s1 + $0x8] sm:$0xf]
        %v291 = vld [vmem:[%s1 + $0xc] sm:$0xf]
        %v292 = vld [vmem:[%s1 + $0x10] sm:$0xf]
        %v293 = vld [vmem:[%s1 + $0x14] sm:$0xf]
        %v294 = vld [vmem:[%s1 + $0x18] sm:$0xf]
        %v295 = vld [vmem:[%s1 + $0x1c] sm:$0xf]
        %v296 = vld [vmem:[%s1 + $0x20] sm:$0xf]
        %v297 = vld [vmem:[%s1 + $0x24] sm:$0xf]
        %v298 = vld [vmem:[%s1 + $0x28] sm:$0xf]
        %v299 = vld [vmem:[%s1 + $0x2c] sm:$0xf]
        %v300 = vld [vmem:[%s1 + $0x30] sm:$0xf]
        %v301 = vld [vmem:[%s1 + $0x34] sm:$0xf]
        %v302 = vld [vmem:[%s1 + $0x38] sm:$0xf]
        %v303 = vld [vmem:[%s1 + $0x3c] sm:$0xf]
        %v304 = vld [vmem:[%s2] sm:$0xff]
        %v305 = vld [vmem:[%s2 + $0x8] sm:$0xff]
        %v306 = vld [vmem:[%s2 + $0x10] sm:$0xff]
        %v307 = vld [vmem:[%s2 + $0x18] sm:$0xff]
        %v308 = vld [vmem:[%s2 + $0x20] sm:$0xff]
        %v309 = vld [vmem:[%s2 + $0x28] sm:$0xff]
        %v310 = vld [vmem:[%s2 + $0x30] sm:$0xff]
        %v311 = vld [vmem:[%s2 + $0x38] sm:$0xff]
        %v312 = vld [vmem:[%s2 + $0x40] sm:$0xff]
        %v313 = vld [vmem:[%s2 + $0x48] sm:$0xff]
        %v314 = vld [vmem:[%s2 + $0x50] sm:$0xff]
        %v315 = vld [vmem:[%s2 + $0x58] sm:$0xff]
        %v316 = vld [vmem:[%s2 + $0x60] sm:$0xff]
        %v317 = vld [vmem:[%s2 + $0x68] sm:$0xff]
        %v318 = vld [vmem:[%s2 + $0x70] sm:$0xff]
        %v319 = vld [vmem:[%s2 + $0x78] sm:$0xff]
        %321 = vset.pattern.permute.xlu0 0
        %322 = vperm.xlu0 %321, %v304
        %v323 = vpop.permute.xlu0 %322
        %326 = vset.pattern.permute.xlu0 0
        %327 = vperm.xlu0 %326, %v305
        %v328 = vpop.permute.xlu0 %327
        %331 = vset.pattern.permute.xlu0 0
        %332 = vperm.xlu0 %331, %v306
        %v333 = vpop.permute.xlu0 %332
        %336 = vset.pattern.permute.xlu0 0
        %337 = vperm.xlu0 %336, %v307
        %v338 = vpop.permute.xlu0 %337
        %341 = vset.pattern.permute.xlu0 0
        %342 = vperm.xlu0 %341, %v308
        %v343 = vpop.permute.xlu0 %342
        %346 = vset.pattern.permute.xlu0 0
        %347 = vperm.xlu0 %346, %v309
        %v348 = vpop.permute.xlu0 %347
        %351 = vset.pattern.permute.xlu0 0
        %352 = vperm.xlu0 %351, %v310
        %v353 = vpop.permute.xlu0 %352
        %356 = vset.pattern.permute.xlu0 0
        %357 = vperm.xlu0 %356, %v311
        %v358 = vpop.permute.xlu0 %357
        %361 = vset.pattern.permute.xlu0 0
        %362 = vperm.xlu0 %361, %v312
        %v363 = vpop.permute.xlu0 %362
        %366 = vset.pattern.permute.xlu0 0
        %367 = vperm.xlu0 %366, %v313
        %v368 = vpop.permute.xlu0 %367
        %371 = vset.pattern.permute.xlu0 0
        %372 = vperm.xlu0 %371, %v314
        %v373 = vpop.permute.xlu0 %372
        %376 = vset.pattern.permute.xlu0 0
        %377 = vperm.xlu0 %376, %v315
        %v378 = vpop.permute.xlu0 %377
        %381 = vset.pattern.permute.xlu0 0
        %382 = vperm.xlu0 %381, %v316
        %v383 = vpop.permute.xlu0 %382
        %386 = vset.pattern.permute.xlu0 0
        %387 = vperm.xlu0 %386, %v317
        %v388 = vpop.permute.xlu0 %387
        %391 = vset.pattern.permute.xlu0 0
        %392 = vperm.xlu0 %391, %v318
        %v393 = vpop.permute.xlu0 %392
        %396 = vset.pattern.permute.xlu0 0
        %397 = vperm.xlu0 %396, %v319
        %v398 = vpop.permute.xlu0 %397
        %v416 = vunpack.c.l.b16 %v288
        %v417 = vunpack.c.l.b16 %v289
        %v418 = vunpack.c.l.b16 %v290
        %v419 = vunpack.c.l.b16 %v291
        %v420 = vunpack.c.l.b16 %v292
        %v421 = vunpack.c.l.b16 %v293
        %v422 = vunpack.c.l.b16 %v294
        %v423 = vunpack.c.l.b16 %v295
        %v424 = vunpack.c.l.b16 %v296
        %v425 = vunpack.c.l.b16 %v297
        %v426 = vunpack.c.l.b16 %v298
        %v427 = vunpack.c.l.b16 %v299
        %v428 = vunpack.c.l.b16 %v300
        %v429 = vunpack.c.l.b16 %v301
        %v430 = vunpack.c.l.b16 %v302
        %v431 = vunpack.c.l.b16 %v303
        %v432 = vpack.c.b16 %v417, %v416
        %v433 = vpack.c.b16 %v419, %v418
        %v434 = vpack.c.b16 %v421, %v420
        %v435 = vpack.c.b16 %v423, %v422
        %v436 = vpack.c.b16 %v425, %v424
        %v437 = vpack.c.b16 %v427, %v426
        %v438 = vpack.c.b16 %v429, %v428
        %v439 = vpack.c.b16 %v431, %v430
        %v442 = vunpack.c.l.b16 %v286
        %v443 = vunpack.c.h.b16 %v286
        %v444 = vunpack.c.l.b16 %v287
        %v445 = vunpack.c.h.b16 %v287
        %v446 = vpack.c.b16 %v444, %v442
        %v447 = vpack.c.b16 %v445, %v443
        %vm450 = vcmask 130048
        %v452 = vsel %vm450, %v432, 0
        %v455 = vsel %vm450, %v433, 0
        %v458 = vsel %vm450, %v434, 0
        %v461 = vsel %vm450, %v435, 0
        %v464 = vsel %vm450, %v436, 0
        %v467 = vsel %vm450, %v437, 0
        %v470 = vsel %vm450, %v438, 0
        %v473 = vsel %vm450, %v439, 0
        %475 = vmatprep.subr.bf16.mxu0 0
        %476 = vmatpush1.bf16.msra.mxu0 0
        %477 = vmatprep.subr.bf16.mxu0 0
        %478 = vmatpush1.bf16.msra.mxu0 0
        %479 = vmatprep.subr.bf16.mxu0 0
        %480 = vmatpush1.bf16.msra.mxu0 0
        %481 = vmatprep.subr.bf16.mxu0 0
        %482 = vmatpush1.bf16.msra.mxu0 0
        %483 = vmatprep.subr.bf16.mxu0 0
        %484 = vmatpush1.bf16.msra.mxu0 0
        %485 = vmatprep.subr.bf16.mxu0 0
        %486 = vmatpush1.bf16.msra.mxu0 0
        %487 = vmatprep.subr.bf16.mxu0 0
        %488 = vmatpush1.bf16.msra.mxu0 0
        %489 = vmatprep.subr.bf16.mxu0 %v447
        %490 = vmatpush1.bf16.msra.mxu0 %v446
        %491 = vmatprep.subr.bf16.mxu0 0
        %492 = vmatpush2.bf16.msra.mxu0 0
        %493 = vmatprep.subr.bf16.mxu0 0
        %494 = vmatpush2.bf16.msra.mxu0 0
        %495 = vmatprep.subr.bf16.mxu0 0
        %496 = vmatpush2.bf16.msra.mxu0 0
        %497 = vmatprep.subr.bf16.mxu0 0
        %498 = vmatpush2.bf16.msra.mxu0 0
        %499 = vmatprep.subr.bf16.mxu0 0
        %500 = vmatpush2.bf16.msra.mxu0 0
        %501 = vmatprep.subr.bf16.mxu0 0
        %502 = vmatpush2.bf16.msra.mxu0 0
        %503 = vmatprep.subr.bf16.mxu0 0
        %504 = vmatpush2.bf16.msra.mxu0 0
        %505 = vmatprep.subr.bf16.mxu0 0
        %506 = vmatpush2.bf16.msra.mxu0 0
        %507 = vmatprep.mubr.bf16.mxu0 0
        %508 = vmatmul.mubr.bf16.gmra.mxu0 %v452
        %v509 = vpop.f32.mrf.mxu0
        %v510 = vadd.f32 %v323, %v509
        %v511 = vpop.f32.mrf.mxu0
        %v512 = vadd.f32 %v323, %v511
        %v513 = vpop.f32.mrf.mxu0
        %v514 = vadd.f32 %v328, %v513
        %v515 = vpop.f32.mrf.mxu0
        %v516 = vadd.f32 %v328, %v515
        %517 = vmatprep.mubr.bf16.mxu0 0
        %518 = vmatmul.mubr.bf16.gmra.mxu0 %v455
        %v519 = vpop.f32.mrf.mxu0
        %v520 = vadd.f32 %v333, %v519
        %v521 = vpop.f32.mrf.mxu0
        %v522 = vadd.f32 %v333, %v521
        %v523 = vpop.f32.mrf.mxu0
        %v524 = vadd.f32 %v338, %v523
        %v525 = vpop.f32.mrf.mxu0
        %v526 = vadd.f32 %v338, %v525
        %527 = vmatprep.mubr.bf16.mxu0 0
        %528 = vmatmul.mubr.bf16.gmra.mxu0 %v458
        %v529 = vpop.f32.mrf.mxu0
        %v530 = vadd.f32 %v343, %v529
        %v531 = vpop.f32.mrf.mxu0
        %v532 = vadd.f32 %v343, %v531
        %v533 = vpop.f32.mrf.mxu0
        %v534 = vadd.f32 %v348, %v533
        %v535 = vpop.f32.mrf.mxu0
        %v536 = vadd.f32 %v348, %v535
        %537 = vmatprep.mubr.bf16.mxu0 0
        %538 = vmatmul.mubr.bf16.gmra.mxu0 %v461
        %v539 = vpop.f32.mrf.mxu0
        %v540 = vadd.f32 %v353, %v539
        %v541 = vpop.f32.mrf.mxu0
        %v542 = vadd.f32 %v353, %v541
        %v543 = vpop.f32.mrf.mxu0
        %v544 = vadd.f32 %v358, %v543
        %v545 = vpop.f32.mrf.mxu0
        %v546 = vadd.f32 %v358, %v545
        %547 = vmatprep.mubr.bf16.mxu0 0
        %548 = vmatmul.mubr.bf16.gmra.mxu0 %v464
        %v549 = vpop.f32.mrf.mxu0
        %v550 = vadd.f32 %v363, %v549
        %v551 = vpop.f32.mrf.mxu0
        %v552 = vadd.f32 %v363, %v551
        %v553 = vpop.f32.mrf.mxu0
        %v554 = vadd.f32 %v368, %v553
        %v555 = vpop.f32.mrf.mxu0
        %v556 = vadd.f32 %v368, %v555
        %557 = vmatprep.mubr.bf16.mxu0 0
        %558 = vmatmul.mubr.bf16.gmra.mxu0 %v467
        %v559 = vpop.f32.mrf.mxu0
        %v560 = vadd.f32 %v373, %v559
        %v561 = vpop.f32.mrf.mxu0
        %v562 = vadd.f32 %v373, %v561
        %v563 = vpop.f32.mrf.mxu0
        %v564 = vadd.f32 %v378, %v563
        %v565 = vpop.f32.mrf.mxu0
        %v566 = vadd.f32 %v378, %v565
        %567 = vmatprep.mubr.bf16.mxu0 0
        %568 = vmatmul.mubr.bf16.gmra.mxu0 %v470
        %v569 = vpop.f32.mrf.mxu0
        %v570 = vadd.f32 %v383, %v569
        %v571 = vpop.f32.mrf.mxu0
        %v572 = vadd.f32 %v383, %v571
        %v573 = vpop.f32.mrf.mxu0
        %v574 = vadd.f32 %v388, %v573
        %v575 = vpop.f32.mrf.mxu0
        %v576 = vadd.f32 %v388, %v575
        %577 = vmatprep.mubr.bf16.mxu0 0
        %578 = vmatmul.mubr.bf16.gmra.mxu0 %v473
        %v579 = vpop.f32.mrf.mxu0
        %v580 = vadd.f32 %v393, %v579
        %v581 = vpop.f32.mrf.mxu0
        %v582 = vadd.f32 %v393, %v581
        %v583 = vpop.f32.mrf.mxu0
        %v584 = vadd.f32 %v398, %v583
        %v585 = vpop.f32.mrf.mxu0
        %v586 = vadd.f32 %v398, %v585
        %587 = vdwg.mxu0
        %v588 = vmul.f32 %v510, %v510
        %v589 = vmul.f32 %v512, %v512
        %v590 = vmul.f32 %v514, %v514
        %v591 = vmul.f32 %v516, %v516
        %v592 = vmul.f32 %v520, %v520
        %v593 = vmul.f32 %v522, %v522
        %v594 = vmul.f32 %v524, %v524
        %v595 = vmul.f32 %v526, %v526
        %v596 = vmul.f32 %v530, %v530
        %v597 = vmul.f32 %v532, %v532
        %v598 = vmul.f32 %v534, %v534
        %v599 = vmul.f32 %v536, %v536
        %v600 = vmul.f32 %v540, %v540
        %v601 = vmul.f32 %v542, %v542
        %v602 = vmul.f32 %v544, %v544
        %v603 = vmul.f32 %v546, %v546
        %v604 = vmul.f32 %v550, %v550
        %v605 = vmul.f32 %v552, %v552
        %v606 = vmul.f32 %v554, %v554
        %v607 = vmul.f32 %v556, %v556
        %v608 = vmul.f32 %v560, %v560
        %v609 = vmul.f32 %v562, %v562
        %v610 = vmul.f32 %v564, %v564
        %v611 = vmul.f32 %v566, %v566
        %v612 = vmul.f32 %v570, %v570
        %v613 = vmul.f32 %v572, %v572
        %v614 = vmul.f32 %v574, %v574
        %v615 = vmul.f32 %v576, %v576
        %v616 = vmul.f32 %v580, %v580
        %v617 = vmul.f32 %v582, %v582
        %v618 = vmul.f32 %v584, %v584
        %v619 = vmul.f32 %v586, %v586
        %v620 = vadd.f32 %v588, %v590
        %v621 = vadd.f32 %v620, %v592
        %v622 = vadd.f32 %v621, %v594
        %v623 = vadd.f32 %v622, %v596
        %v624 = vadd.f32 %v623, %v598
        %v625 = vadd.f32 %v624, %v600
        %v626 = vadd.f32 %v625, %v602
        %v627 = vadd.f32 %v626, %v604
        %v628 = vadd.f32 %v627, %v606
        %v629 = vadd.f32 %v628, %v608
        %v630 = vadd.f32 %v629, %v610
        %v631 = vadd.f32 %v630, %v612
        %v632 = vadd.f32 %v631, %v614
        %v633 = vadd.f32 %v632, %v616
        %v634 = vadd.f32 %v633, %v618
        %v635 = vrot.slane %v634, 4
        %v636 = vadd.f32 %v634, %v635
        %v637 = vrot.slane %v636, 2
        %v638 = vadd.f32 %v636, %v637
        %v639 = vrot.slane %v638, 1
        %v640 = vadd.f32 %v638, %v639
        %v641 = vadd.f32 %v589, %v591
        %v642 = vadd.f32 %v641, %v593
        %v643 = vadd.f32 %v642, %v595
        %v644 = vadd.f32 %v643, %v597
        %v645 = vadd.f32 %v644, %v599
        %v646 = vadd.f32 %v645, %v601
        %v647 = vadd.f32 %v646, %v603
        %v648 = vadd.f32 %v647, %v605
        %v649 = vadd.f32 %v648, %v607
        %v650 = vadd.f32 %v649, %v609
        %v651 = vadd.f32 %v650, %v611
        %v652 = vadd.f32 %v651, %v613
        %v653 = vadd.f32 %v652, %v615
        %v654 = vadd.f32 %v653, %v617
        %v655 = vadd.f32 %v654, %v619
        %v656 = vrot.slane %v655, 4
        %v657 = vadd.f32 %v655, %v656
        %v658 = vrot.slane %v657, 2
        %v659 = vadd.f32 %v657, %v658
        %v660 = vrot.slane %v659, 1
        %v661 = vadd.f32 %v659, %v660
        %v662 = vmax.f32 %v640, 1e-24
        %v663 = vmax.f32 %v661, 1e-24
        %v664 = vrsqrt.pop %v662
        %v665 = vrsqrt.pop %v663
        %v666 = vmul.f32 %v510, %v664
        %v667 = vmul.f32 %v512, %v665
        %v668 = vmul.f32 %v514, %v664
        %v669 = vmul.f32 %v516, %v665
        %v670 = vmul.f32 %v520, %v664
        %v671 = vmul.f32 %v522, %v665
        %v672 = vmul.f32 %v524, %v664
        %v673 = vmul.f32 %v526, %v665
        %v674 = vmul.f32 %v530, %v664
        %v675 = vmul.f32 %v532, %v665
        %v676 = vmul.f32 %v534, %v664
        %v677 = vmul.f32 %v536, %v665
        %v678 = vmul.f32 %v540, %v664
        %v679 = vmul.f32 %v542, %v665
        %v680 = vmul.f32 %v544, %v664
        %v681 = vmul.f32 %v546, %v665
        %v682 = vmul.f32 %v550, %v664
        %v683 = vmul.f32 %v552, %v665
        %v684 = vmul.f32 %v554, %v664
        %v685 = vmul.f32 %v556, %v665
        %v686 = vmul.f32 %v560, %v664
        %v687 = vmul.f32 %v562, %v665
        %v688 = vmul.f32 %v564, %v664
        %v689 = vmul.f32 %v566, %v665
        %v690 = vmul.f32 %v570, %v664
        %v691 = vmul.f32 %v572, %v665
        %v692 = vmul.f32 %v574, %v664
        %v693 = vmul.f32 %v576, %v665
        %v694 = vmul.f32 %v580, %v664
        %v695 = vmul.f32 %v582, %v665
        %v696 = vmul.f32 %v584, %v664
        %v697 = vmul.f32 %v586, %v665
        %v698 = vpack.c.bf16 %v668, %v666
        %v699 = vpack.c.bf16 %v669, %v667
        %v700 = vpack.c.bf16 %v672, %v670
        %v701 = vpack.c.bf16 %v673, %v671
        %v702 = vpack.c.bf16 %v676, %v674
        %v703 = vpack.c.bf16 %v677, %v675
        %v704 = vpack.c.bf16 %v680, %v678
        %v705 = vpack.c.bf16 %v681, %v679
        %v706 = vpack.c.bf16 %v684, %v682
        %v707 = vpack.c.bf16 %v685, %v683
        %v708 = vpack.c.bf16 %v688, %v686
        %v709 = vpack.c.bf16 %v689, %v687
        %v710 = vpack.c.bf16 %v692, %v690
        %v711 = vpack.c.bf16 %v693, %v691
        %v712 = vpack.c.bf16 %v696, %v694
        %v713 = vpack.c.bf16 %v697, %v695
        %v714 = vld [vmem:[%s3] sm:$0xf]
        %v715 = vld [vmem:[%s4] sm:$0xff]
        %717 = vset.pattern.permute.xlu0 0
        %718 = vperm.xlu0 %717, %v715
        %v719 = vpop.permute.xlu0 %718
        %721 = vmatprep.subr.bf16.mxu0 %v713
        %722 = vmatpush1.bf16.msra.mxu0 %v712
        %723 = vmatprep.subr.bf16.mxu0 %v711
        %724 = vmatpush1.bf16.msra.mxu0 %v710
        %725 = vmatprep.subr.bf16.mxu0 %v709
        %726 = vmatpush1.bf16.msra.mxu0 %v708
        %727 = vmatprep.subr.bf16.mxu0 %v707
        %728 = vmatpush1.bf16.msra.mxu0 %v706
        %729 = vmatprep.subr.bf16.mxu0 %v705
        %730 = vmatpush1.bf16.msra.mxu0 %v704
        %731 = vmatprep.subr.bf16.mxu0 %v703
        %732 = vmatpush1.bf16.msra.mxu0 %v702
        %733 = vmatprep.subr.bf16.mxu0 %v701
        %734 = vmatpush1.bf16.msra.mxu0 %v700
        %735 = vmatprep.subr.bf16.mxu0 %v699
        %736 = vmatpush1.bf16.msra.mxu0 %v698
        %737 = vmatprep.subr.bf16.mxu0 0
        %738 = vmatpush2.bf16.msra.mxu0 0
        %739 = vmatprep.subr.bf16.mxu0 0
        %740 = vmatpush2.bf16.msra.mxu0 0
        %741 = vmatprep.subr.bf16.mxu0 0
        %742 = vmatpush2.bf16.msra.mxu0 0
        %743 = vmatprep.subr.bf16.mxu0 0
        %744 = vmatpush2.bf16.msra.mxu0 0
        %745 = vmatprep.subr.bf16.mxu0 0
        %746 = vmatpush2.bf16.msra.mxu0 0
        %747 = vmatprep.subr.bf16.mxu0 0
        %748 = vmatpush2.bf16.msra.mxu0 0
        %749 = vmatprep.subr.bf16.mxu0 0
        %750 = vmatpush2.bf16.msra.mxu0 0
        %751 = vmatprep.subr.bf16.mxu0 0
        %752 = vmatpush2.bf16.msra.mxu0 0
        %753 = vmatprep.mubr.bf16.mxu0 0
        %754 = vmatmul.mubr.bf16.gmra.mxu0 %v714
        %v755 = vpop.f32.mrf.mxu0
        %v756 = vadd.f32 %v719, %v755
        %v757 = vpop.f32.mrf.mxu0
        %v758 = vadd.f32 %v719, %v757
        %v759 = vpop.f32.mrf.mxu0
        %v760 = vpop.f32.mrf.mxu0
        %761 = vdwg.mxu0
        %v762 = vrot.slane %v756, 4
        %v763 = vmax.f32 %v756, %v762
        %v764 = vrot.slane %v763, 2
        %v765 = vmax.f32 %v763, %v764
        %v766 = vrot.slane %v765, 1
        %v767 = vmax.f32 %v765, %v766
        %v768 = vrot.slane %v758, 4
        %v769 = vmax.f32 %v758, %v768
        %v770 = vrot.slane %v769, 2
        %v771 = vmax.f32 %v769, %v770
        %v772 = vrot.slane %v771, 1
        %v773 = vmax.f32 %v771, %v772
        %v774 = vsub.f32 %v756, %v767
        %v775 = vsub.f32 %v758, %v773
        %v776 = vmul.f32 %v774, 1.442695
        %v777 = vpow.pop %v776
        %v778 = vmul.f32 %v775, 1.442695
        %v779 = vpow.pop %v778
        %v780 = vrot.slane %v777, 4
        %v781 = vadd.f32 %v777, %v780
        %v782 = vrot.slane %v781, 2
        %v783 = vadd.f32 %v781, %v782
        %v784 = vrot.slane %v783, 1
        %v785 = vadd.f32 %v783, %v784
        %v786 = vrot.slane %v779, 4
        %v787 = vadd.f32 %v779, %v786
        %v788 = vrot.slane %v787, 2
        %v789 = vadd.f32 %v787, %v788
        %v790 = vrot.slane %v789, 1
        %v791 = vadd.f32 %v789, %v790
        %v792 = vrcp.pop %v785
        %v793 = vrcp.pop %v791
        %v794 = vmul.f32 %v777, %v792
        %v795 = vmul.f32 %v779, %v793
        %v796 = vld [vmem:[#allocation2] sm:$0xff]
        %v797 = vpack.c.bf16 %v794, %v794
        %v798 = vpack.c.bf16 %v795, %v795
        %799 = vmatprep.subr.bf16.mxu0 %v713
        %800 = vmatpush1.bf16.xpose.msra.mxu0 %v712
        %801 = vmatprep.subr.bf16.mxu0 %v711
        %802 = vmatpush1.bf16.xpose.msra.mxu0 %v710
        %803 = vmatprep.subr.bf16.mxu0 %v709
        %804 = vmatpush1.bf16.xpose.msra.mxu0 %v708
        %805 = vmatprep.subr.bf16.mxu0 %v707
        %806 = vmatpush1.bf16.xpose.msra.mxu0 %v706
        %807 = vmatprep.subr.bf16.mxu0 %v705
        %808 = vmatpush1.bf16.xpose.msra.mxu0 %v704
        %809 = vmatprep.subr.bf16.mxu0 %v703
        %810 = vmatpush1.bf16.xpose.msra.mxu0 %v702
        %811 = vmatprep.subr.bf16.mxu0 %v701
        %812 = vmatpush1.bf16.xpose.msra.mxu0 %v700
        %813 = vmatprep.subr.bf16.mxu0 %v699
        %814 = vmatpush1.bf16.xpose.msra.mxu0 %v698
        %815 = vmatprep.subr.bf16.mxu0 0
        %816 = vmatpush2.bf16.xpose.msra.mxu0 0
        %817 = vmatprep.subr.bf16.mxu0 0
        %818 = vmatpush2.bf16.xpose.msra.mxu0 0
        %819 = vmatprep.subr.bf16.mxu0 0
        %820 = vmatpush2.bf16.xpose.msra.mxu0 0
        %821 = vmatprep.subr.bf16.mxu0 0
        %822 = vmatpush2.bf16.xpose.msra.mxu0 0
        %823 = vmatprep.subr.bf16.mxu0 0
        %824 = vmatpush2.bf16.xpose.msra.mxu0 0
        %825 = vmatprep.subr.bf16.mxu0 0
        %826 = vmatpush2.bf16.xpose.msra.mxu0 0
        %827 = vmatprep.subr.bf16.mxu0 0
        %828 = vmatpush2.bf16.xpose.msra.mxu0 0
        %829 = vmatprep.subr.bf16.mxu0 0
        %830 = vmatpush2.bf16.xpose.msra.mxu0 0
        %831 = vmatprep.mubr.bf16.mxu0 %v798
        %832 = vmatmul.mubr.bf16.gmra.mxu0 %v797
        %v833 = vpop.f32.mrf.mxu0
        %v834 = vadd.f32 0.0, %v833
        %v835 = vpop.f32.mrf.mxu0
        %v836 = vpop.f32.mrf.mxu0
        %v837 = vpop.f32.mrf.mxu0
        %838 = vdwg.mxu0
        %v839 = vadd.f32 %v796, %v834
        %840 = vst [vmem:[#allocation2] sm:$0xff] %v839
        %v841 = vld [vmem:[#allocation3] sm:$0xff]
        %v842 = vadd.f32 %v794, %v795
        %843 = vadd.xlane.f32.xlu0 %v842
        %v844 = vpop.xlane.xlu0 %843
        %v845 = vadd.f32 %v841, %v844
        %vm846 = vcmask 7168
        %847 = vst.msk [vmem:[#allocation3] sm:$0xff] %vm846, %v845
        // Predicated region
        $region49: #{tpu_custom_call.1} parent=43 // pred_check
          %p848 = pneg %p279
        $region50: #{tpu_custom_call.1} parent=43 // pred_check_branch
          %850 = sbr.rel (%p848) target = $region52
        $region51: #{tpu_custom_call.1} parent=43 // pred_region
          %v851 = vld [vmem:[#allocation2] sm:$0xff]
          %v852 = vld [vmem:[%s5] sm:$0xff]
          %v853 = vld [vmem:[#allocation3] sm:$0xff]
          %855 = vset.pattern.permute.xlu0 0
          %856 = vperm.xlu0 %855, %v853
          %v857 = vpop.permute.xlu0 %856
          %v859 = vmul.f32 %v852, %v857
          %v860 = vsub.f32 %v851, %v859
          %v861 = vmul.f32 %v860, %v860
          %862 = vadd.xlane.f32.xlu0 %v861
          %v863 = vpop.xlane.xlu0 %862
          %v864 = vmax.f32 %v863, 1e-24
          %v865 = vrsqrt.pop %v864
          %v866 = vmul.f32 %v860, %v865
          %v867 = vmul.f32 %v866, %v866
          %868 = vadd.xlane.f32.xlu0 %v867
          %v869 = vpop.xlane.xlu0 %868
          %v870 = vrot.slane %v869, 4
          %v871 = vadd.f32 %v869, %v870
          %v872 = vrot.slane %v871, 2
          %v873 = vadd.f32 %v871, %v872
          %v874 = vrot.slane %v873, 1
          %v875 = vadd.f32 %v873, %v874
          %s876 = vtos %v875
          %s877 = smax.f32 %s876, 1e-24
          %v878 = vstv %s877
          %v879 = vrsqrt.pop %v878
          %s880 = vtos %v879
          %v881 = vstv %s880
          %v882 = vmul.f32 %v866, %v881
          %883 = vst [vmem:[%s267] sm:$0xff] %v882
        $region52: #{tpu_custom_call.1} parent=43 // pred_fallthru
          _
        %s884 = sand.u32 %s173, 1
        %s885 = scalar_lea.sflag [#allocation5], %s884
        %s886 = sand.u32 %s173, 1
        %s887 = smul.addr %s886, 8
        %s888 = scalar_lea.vmem [#allocation4], %s887
        // Predicated region
        $region53: #{tpu_custom_call.1} parent=43 // pred_check
          %p889 = pneg %p183
        $region54: #{tpu_custom_call.1} parent=43 // pred_check_branch
          %891 = sbr.rel (%p889) target = $region56
        $region55: #{tpu_custom_call.1} parent=43 // pred_region
          %s893 = ssub.s32 128, 128
          %894 = vsyncadd %s885, %s893
          %s895 = smul.addr %s24, 128
          %s896 = scalar_lea.hbm %s6, %s895
          %s898 = sshll.u32 %s888, 4
          %s899 = int_to_ptr.vmem [resolvable:$true] %s898
          %901 = dma.vmem_to_hbm [thread:$0]  %s899, 128, %s896, %s885
        $region56: #{tpu_custom_call.1} parent=43 // pred_fallthru
          _
      $region44: #{tpu_custom_call.1} parent=5 // pred_fallthru
        _
      %p902 = scmp.le.s32.totalorder 2, %s15
      // Predicated region
      $region57: #{tpu_custom_call.1} parent=5 // pred_check
        %p903 = pneg %p902
      $region58: #{tpu_custom_call.1} parent=5 // pred_check_branch
        %905 = sbr.rel (%p903) target = $region60
      $region59: #{tpu_custom_call.1} parent=5 // pred_region
        %s906 = ssub.s32 %s15, 2
        // Predicated region
        $region61: #{tpu_custom_call.1} parent=59 // pred_check
          %p907 = pneg %p189
        $region62: #{tpu_custom_call.1} parent=59 // pred_check_branch
          %909 = sbr.rel (%p907) target = $region64
        $region63: #{tpu_custom_call.1} parent=59 // pred_region
          %s910 = sand.u32 %s174, 1
          %s911 = scalar_lea.sflag [#allocation5], %s910
          %s912 = sand.u32 %s174, 1
          %s913 = smul.addr %s912, 8
          %s914 = scalar_lea.vmem [#allocation4], %s913
          %915 = dma.done %s911, 128
        $region64: #{tpu_custom_call.1} parent=59 // pred_fallthru
          _
      $region60: #{tpu_custom_call.1} parent=5 // pred_fallthru
        _
    $region6: #{tpu_custom_call.1} parent=1 // loop_footer
      %s19 = sadd.s32 1, %s15
    $region7: #{tpu_custom_call.1} parent=1 // loop_footer_branch
      %14 = sbr.rel target = $region3
    $region8: #{tpu_custom_call.1} parent=1 // loop_exit
      _
    %916 = vsyncpa [#allocation5], 1
    %s917 = scalar_lea.sflag [#allocation5], 1
    %918 = vsyncpa %s917, 1

</llo_original>
